<compile_context>
chip_gen: v5e
topology: v5e:2x2
jax: 0.10.0
libtpu: 0.0.40
codegen_flags: <defaults>
</compile_context>

<pallas_src>
import jax
import jax.numpy as jnp
from jax.experimental import pallas as pl
from jax.experimental.pallas import tpu as pltpu

# Logical sizes (from the PyTorch module) and their lane-padded versions.
S_IN = 8      # state features
A_IN = 1      # action features
H1 = 200      # fc_s / fc_a width
H2 = 300      # fc_q width
H1P = 256     # 200 padded up to a multiple of 128
H2P = 384     # 300 padded up to a multiple of 128


def qnet_kernel(x_ref, a_ref, ws_ref, wq1_ref, wq2_ref,
                v256_ref, v384_ref, bo_ref, out_ref):
    # Unpack packed row-vectors (static sublane slices, stay in vregs).
    bs = v256_ref[0:1, :]        # (1, H1P)  fc_s bias
    ba = v256_ref[1:2, :]        # (1, H1P)  fc_a bias
    wa = v256_ref[2:3, :]        # (1, H1P)  fc_a weight row (fan_in = 1)
    bq = v384_ref[0:1, :]        # (1, H2P)  fc_q bias
    wo = v384_ref[1:2, :]        # (1, H2P)  fc_out weight row (fan_out = 1)

    # h1 = relu(x @ Ws + bs)  -- MXU, bf16 inputs, f32 accumulate.
    h1 = jnp.maximum(
        jnp.dot(x_ref[...].astype(jnp.bfloat16), ws_ref[...],
                preferred_element_type=jnp.float32) + bs, 0.0)

    # h2 = relu(a (x) wa + ba)  -- K=1 outer product: pure VPU, skip the MXU.
    h2 = jnp.maximum(a_ref[...] * wa + ba, 0.0)

    # q = relu(cat([h1, h2]) @ Wq + bq), concat folded into a split matmul.
    q = jnp.maximum(
        jnp.dot(h1.astype(jnp.bfloat16), wq1_ref[...],
                preferred_element_type=jnp.float32)
        + jnp.dot(h2.astype(jnp.bfloat16), wq2_ref[...],
                  preferred_element_type=jnp.float32)
        + bq, 0.0)

    # out = q . wo + bo  -- N=1: VPU multiply + XLU lane reduce, skip the MXU.
    out_ref[...] = jnp.sum(q * wo, axis=-1, keepdims=True) + bo_ref[0]


def _round_up(n, m):
    return ((n + m - 1) // m) * m


def qnet_forward(x, a, packed, *, block_b=512):
    """QNet forward. `packed` comes from pack_qnet_params (call once at init)."""
    B = x.shape[0]
    TB = min(block_b, _round_up(B, 8))        # batch tile, multiple of 8
    Bp = _round_up(B, TB)
    if Bp != B:                               # zero-pad a ragged batch
        x = jnp.pad(x, ((0, Bp - B), (0, 0)))
        a = jnp.pad(a, ((0, Bp - B), (0, 0)))

    batch_spec = lambda last: pl.BlockSpec((TB, last), lambda i: (i, 0))
    resident = lambda shape: pl.BlockSpec(shape, lambda i: (0, 0))  # weights stay put

    out = pl.pallas_call(
        qnet_kernel,
        out_shape=jax.ShapeDtypeStruct((Bp, 1), jnp.float32),
        grid=(Bp // TB,),
        in_specs=[
            batch_spec(S_IN),                                    # x      (TB, 8)
            batch_spec(A_IN),                                    # a      (TB, 1)
            resident((S_IN, H1P)),                               # Ws     (8, 256)  bf16
            resident((H1P, H2P)),                                # Wq1    (256,384) bf16
            resident((H1P, H2P)),                                # Wq2    (256,384) bf16
            resident((3, H1P)),                                  # [bs; ba; wa]
            resident((2, H2P)),                                  # [bq; wo]
            pl.BlockSpec(memory_space=pltpu.MemorySpace.SMEM),   # bo scalar
        ],
        out_specs=batch_spec(1),
        compiler_params=pltpu.CompilerParams(
            dimension_semantics=("parallel",)),
    )(x, a, packed["ws"], packed["wq1"], packed["wq2"],
      packed["vec256"], packed["vec384"], packed["bo"])

    return out[:B] if Bp != B else out


def pack_qnet_params(params, *, matmul_dtype=jnp.bfloat16):
    """One-time packing: split the concat, zero-pad to lane multiples of 128,
    cast MXU weights to bf16 and pack row-vectors.  NOT in the per-call path."""
    def pad2(arr, rows, cols):
        r, c = arr.shape
        return jnp.pad(arr, ((0, rows - r), (0, cols - c)))

    ws = pad2(params["ws"], S_IN, H1P).astype(matmul_dtype)            # (8, 256)
    wq1 = pad2(params["wq"][:H1, :], H1P, H2P).astype(matmul_dtype)    # (256, 384)
    wq2 = pad2(params["wq"][H1:, :], H1P, H2P).astype(matmul_dtype)    # (256, 384)
    bs = pad2(params["bs"], 1, H1P)
    ba = pad2(params["ba"], 1, H1P)
    wa = pad2(params["wa"], 1, H1P)                                    # (1, 256)
    bq = pad2(params["bq"], 1, H2P)
    wo = pad2(params["wo"].T, 1, H2P)                                  # (1, 384)
    vec256 = jnp.concatenate([bs, ba, wa], axis=0)                     # (3, 256)
    vec384 = jnp.concatenate([bq, wo], axis=0)                         # (2, 384)
    bo = params["bo"].reshape(1).astype(jnp.float32)                   # SMEM scalar
    return dict(ws=ws, wq1=wq1, wq2=wq2, vec256=vec256, vec384=vec384, bo=bo)


def init_params(key):
    """nn.Linear-style init U(-1/sqrt(fan_in), 1/sqrt(fan_in)); weights stored
    (in_features, out_features), i.e. transposed vs. torch, so layers are h @ W + b."""
    def linear(key, fan_in, fan_out):
        kw, kb = jax.random.split(key)
        bound = 1.0 / jnp.sqrt(fan_in)
        w = jax.random.uniform(kw, (fan_in, fan_out), jnp.float32, -bound, bound)
        b = jax.random.uniform(kb, (1, fan_out), jnp.float32, -bound, bound)
        return w, b

    k1, k2, k3, k4 = jax.random.split(key, 4)
    ws, bs = linear(k1, S_IN, H1)     # fc_s
    wa, ba = linear(k2, A_IN, H1)     # fc_a
    wq, bq = linear(k3, 2 * H1, H2)   # fc_q
    wo, bo = linear(k4, H2, 1)        # fc_out
    return dict(ws=ws, bs=bs, wa=wa, ba=ba, wq=wq, bq=bq, wo=wo, bo=bo)


def qnet_reference(x, a, params):
    h1 = jax.nn.relu(x @ params["ws"] + params["bs"])
    h2 = jax.nn.relu(a @ params["wa"] + params["ba"])
    cat = jnp.concatenate([h1, h2], axis=1)
    q = jax.nn.relu(cat @ params["wq"] + params["bq"])
    return q @ params["wo"] + params["bo"]


# TODO(synk): the optim.Adam optimizer in the PyTorch module is training-time state
# and is not part of the forward pass; it is intentionally not translated.

if __name__ == "__main__":
    key = jax.random.PRNGKey(0)
    kp, kx, ka = jax.random.split(key, 3)

    params = init_params(kp)              # logical f32 params (matches torch layout)
    packed = pack_qnet_params(params)     # one-time: split/pad/bf16-cast/pack

    B = 256                               # batched call amortizes weight DMA
    x = jax.random.normal(kx, (B, S_IN), jnp.float32)   # state
    a = jax.random.normal(ka, (B, A_IN), jnp.float32)   # action

    out = qnet_forward(x, a, packed, block_b=128)       # grid = (2,), parallel
    out = jax.block_until_ready(out)

    ref = qnet_reference(x, a, params)
    assert out.shape == (B, 1)
    max_err = float(jnp.max(jnp.abs(out - ref)))
    assert jnp.allclose(out, ref, atol=3e-2, rtol=3e-2), (
        f"mismatch vs reference, max abs err={max_err}")

    print("KERNEL_OK")
</pallas_src>

<mosaic_0001>
module attributes {stable_mosaic.version = 11 : i64} {
  func.func @qnet_kernel(%arg0: i32, %arg1: memref<128x8xf32, #tpu.memory_space<vmem>>, %arg2: memref<128x1xf32, #tpu.memory_space<vmem>>, %arg3: memref<8x256xbf16, #tpu.memory_space<vmem>>, %arg4: memref<256x384xbf16, #tpu.memory_space<vmem>>, %arg5: memref<256x384xbf16, #tpu.memory_space<vmem>>, %arg6: memref<3x256xf32, #tpu.memory_space<vmem>>, %arg7: memref<2x384xf32, #tpu.memory_space<vmem>>, %arg8: memref<1xf32, #tpu.memory_space<smem>>, %arg9: memref<128x1xf32, #tpu.memory_space<vmem>>) attributes {dimension_semantics = [#tpu.dimension_semantics<parallel>], iteration_bounds = array<i64: 2>, scalar_prefetch = 0 : i64, scratch_operands = 0 : i64, tpu.core_type = #tpu.core_type<tc>, window_params = [{transform_indices = @transform_0, window_bounds = array<i64: 128, 8>}, {transform_indices = @transform_1, window_bounds = array<i64: 128, 1>}, {pipeline_mode = #tpu.pipeline_mode<synchronous>, transform_indices = @transform_2, window_bounds = array<i64: 8, 256>}, {pipeline_mode = #tpu.pipeline_mode<synchronous>, transform_indices = @transform_3, window_bounds = array<i64: 256, 384>}, {pipeline_mode = #tpu.pipeline_mode<synchronous>, transform_indices = @transform_4, window_bounds = array<i64: 256, 384>}, {pipeline_mode = #tpu.pipeline_mode<synchronous>, transform_indices = @transform_5, window_bounds = array<i64: 3, 256>}, {pipeline_mode = #tpu.pipeline_mode<synchronous>, transform_indices = @transform_6, window_bounds = array<i64: 2, 384>}, {transform_indices = @transform_7, window_bounds = array<i64: 1>}, {transform_indices = @transform_8, window_bounds = array<i64: 128, 1>}]} {
    %c0 = arith.constant 0 : index
    %c0_0 = arith.constant 0 : index
    %0 = vector.load %arg6[%c0, %c0_0] : memref<3x256xf32, #tpu.memory_space<vmem>>, vector<1x256xf32>
    %c1 = arith.constant 1 : index
    %c0_1 = arith.constant 0 : index
    %1 = vector.load %arg6[%c1, %c0_1] : memref<3x256xf32, #tpu.memory_space<vmem>>, vector<1x256xf32>
    %c2 = arith.constant 2 : index
    %c0_2 = arith.constant 0 : index
    %2 = vector.load %arg6[%c2, %c0_2] : memref<3x256xf32, #tpu.memory_space<vmem>>, vector<1x256xf32>
    %c0_3 = arith.constant 0 : index
    %c0_4 = arith.constant 0 : index
    %3 = vector.load %arg7[%c0_3, %c0_4] : memref<2x384xf32, #tpu.memory_space<vmem>>, vector<1x384xf32>
    %c1_5 = arith.constant 1 : index
    %c0_6 = arith.constant 0 : index
    %4 = vector.load %arg7[%c1_5, %c0_6] : memref<2x384xf32, #tpu.memory_space<vmem>>, vector<1x384xf32>
    %c0_7 = arith.constant 0 : index
    %c0_8 = arith.constant 0 : index
    %5 = vector.load %arg1[%c0_7, %c0_8] : memref<128x8xf32, #tpu.memory_space<vmem>>, vector<128x8xf32>
    %6 = arith.truncf %5 : vector<128x8xf32> to vector<128x8xbf16>
    %c0_9 = arith.constant 0 : index
    %c0_10 = arith.constant 0 : index
    %7 = vector.load %arg3[%c0_9, %c0_10] : memref<8x256xbf16, #tpu.memory_space<vmem>>, vector<8x256xbf16>
    %cst = arith.constant dense<0.000000e+00> : vector<128x256xf32>
    %8 = tpu.matmul %6, %7, %cst {dimension_numbers = #tpu.dot_dimension_numbers<[1], [0], [0], [1], [0, 0, 1, 1], [], []>} : vector<128x8xbf16>, vector<8x256xbf16>, vector<128x256xf32> -> vector<128x256xf32>
    %9 = vector.broadcast %0 : vector<1x256xf32> to vector<128x256xf32>
    %10 = arith.addf %8, %9 : vector<128x256xf32>
    %cst_11 = arith.constant 0.000000e+00 : f32
    %11 = vector.broadcast %cst_11 : f32 to vector<128x256xf32>
    %12 = arith.maximumf %10, %11 : vector<128x256xf32>
    %c0_12 = arith.constant 0 : index
    %c0_13 = arith.constant 0 : index
    %13 = vector.load %arg2[%c0_12, %c0_13] : memref<128x1xf32, #tpu.memory_space<vmem>>, vector<128x1xf32>
    %14 = vector.broadcast %13 : vector<128x1xf32> to vector<128x256xf32>
    %15 = vector.broadcast %2 : vector<1x256xf32> to vector<128x256xf32>
    %16 = arith.mulf %14, %15 : vector<128x256xf32>
    %17 = vector.broadcast %1 : vector<1x256xf32> to vector<128x256xf32>
    %18 = arith.addf %16, %17 : vector<128x256xf32>
    %cst_14 = arith.constant 0.000000e+00 : f32
    %19 = vector.broadcast %cst_14 : f32 to vector<128x256xf32>
    %20 = arith.maximumf %18, %19 : vector<128x256xf32>
    %21 = arith.truncf %12 : vector<128x256xf32> to vector<128x256xbf16>
    %c0_15 = arith.constant 0 : index
    %c0_16 = arith.constant 0 : index
    %22 = vector.load %arg4[%c0_15, %c0_16] : memref<256x384xbf16, #tpu.memory_space<vmem>>, vector<256x384xbf16>
    %cst_17 = arith.constant dense<0.000000e+00> : vector<128x384xf32>
    %23 = tpu.matmul %21, %22, %cst_17 {dimension_numbers = #tpu.dot_dimension_numbers<[1], [0], [0], [1], [0, 0, 1, 1], [], []>} : vector<128x256xbf16>, vector<256x384xbf16>, vector<128x384xf32> -> vector<128x384xf32>
    %24 = arith.truncf %20 : vector<128x256xf32> to vector<128x256xbf16>
    %c0_18 = arith.constant 0 : index
    %c0_19 = arith.constant 0 : index
    %25 = vector.load %arg5[%c0_18, %c0_19] : memref<256x384xbf16, #tpu.memory_space<vmem>>, vector<256x384xbf16>
    %cst_20 = arith.constant dense<0.000000e+00> : vector<128x384xf32>
    %26 = tpu.matmul %24, %25, %cst_20 {dimension_numbers = #tpu.dot_dimension_numbers<[1], [0], [0], [1], [0, 0, 1, 1], [], []>} : vector<128x256xbf16>, vector<256x384xbf16>, vector<128x384xf32> -> vector<128x384xf32>
    %27 = arith.addf %23, %26 : vector<128x384xf32>
    %28 = vector.broadcast %3 : vector<1x384xf32> to vector<128x384xf32>
    %29 = arith.addf %27, %28 : vector<128x384xf32>
    %cst_21 = arith.constant 0.000000e+00 : f32
    %30 = vector.broadcast %cst_21 : f32 to vector<128x384xf32>
    %31 = arith.maximumf %29, %30 : vector<128x384xf32>
    %32 = vector.broadcast %4 : vector<1x384xf32> to vector<128x384xf32>
    %33 = arith.mulf %31, %32 : vector<128x384xf32>
    %cst_22 = arith.constant dense<0.000000e+00> : vector<128xf32>
    %34 = vector.multi_reduction <add>, %33, %cst_22 [1] : vector<128x384xf32> to vector<128xf32>
    %35 = vector.shape_cast %34 : vector<128xf32> to vector<128x1xf32>
    %c0_23 = arith.constant 0 : index
    %36 = memref.load %arg8[%c0_23] : memref<1xf32, #tpu.memory_space<smem>>
    %37 = vector.broadcast %36 : f32 to vector<128x1xf32>
    %38 = arith.addf %35, %37 : vector<128x1xf32>
    %c0_24 = arith.constant 0 : index
    %c0_25 = arith.constant 0 : index
    %39 = vector.load %arg9[%c0_24, %c0_25] : memref<128x1xf32, #tpu.memory_space<vmem>>, vector<128x1xf32>
    tpu.vector_store %arg9[%c0_24, %c0_25], %38 {strides = array<i32>} : memref<128x1xf32, #tpu.memory_space<vmem>>, vector<128x1xf32>,
    return
  }
  func.func @transform_0(%arg0: i32) -> (i32, i32) {
    %c0_i32 = arith.constant 0 : i32
    %c0_i32_0 = arith.constant 0 : i32
    return %arg0, %c0_i32 : i32, i32
  }
  func.func @transform_1(%arg0: i32) -> (i32, i32) {
    %c0_i32 = arith.constant 0 : i32
    %c0_i32_0 = arith.constant 0 : i32
    return %arg0, %c0_i32 : i32, i32
  }
  func.func @transform_2(%arg0: i32) -> (i32, i32) {
    %c0_i32 = arith.constant 0 : i32
    %c0_i32_0 = arith.constant 0 : i32
    %c0_i32_1 = arith.constant 0 : i32
    return %c0_i32, %c0_i32_0 : i32, i32
  }
  func.func @transform_3(%arg0: i32) -> (i32, i32) {
    %c0_i32 = arith.constant 0 : i32
    %c0_i32_0 = arith.constant 0 : i32
    %c0_i32_1 = arith.constant 0 : i32
    return %c0_i32, %c0_i32_0 : i32, i32
  }
  func.func @transform_4(%arg0: i32) -> (i32, i32) {
    %c0_i32 = arith.constant 0 : i32
    %c0_i32_0 = arith.constant 0 : i32
    %c0_i32_1 = arith.constant 0 : i32
    return %c0_i32, %c0_i32_0 : i32, i32
  }
  func.func @transform_5(%arg0: i32) -> (i32, i32) {
    %c0_i32 = arith.constant 0 : i32
    %c0_i32_0 = arith.constant 0 : i32
    %c0_i32_1 = arith.constant 0 : i32
    return %c0_i32, %c0_i32_0 : i32, i32
  }
  func.func @transform_6(%arg0: i32) -> (i32, i32) {
    %c0_i32 = arith.constant 0 : i32
    %c0_i32_0 = arith.constant 0 : i32
    %c0_i32_1 = arith.constant 0 : i32
    return %c0_i32, %c0_i32_0 : i32, i32
  }
  func.func @transform_7(%arg0: i32) -> i32 {
    %c0_i32 = arith.constant 0 : i32
    %c0_i32_0 = arith.constant 0 : i32
    return %c0_i32 : i32
  }
  func.func @transform_8(%arg0: i32) -> (i32, i32) {
    %c0_i32 = arith.constant 0 : i32
    %c0_i32_0 = arith.constant 0 : i32
    return %arg0, %c0_i32 : i32, i32
  }
}

</mosaic_0001>

<llo_original>
// kernel: tpu_custom_call.1
$region0: #{tpu_custom_call.1}
  #allocation0 [shape = 'u32[]', space=smem, size = 0x4, offset = 0x4, fixed_abs, tag = 'smem constant byte address 0x4 - core index']
  #allocation1 [shape = 'u32[72,128]{1,0:T(1,128)}', space=vmem, size = 0x9000, scoped, tag = 'internal scratch']
  #allocation2 [shape = 'f32[1]{0:T(128)S(6)}', space=smem, size = 0x200, scoped, tag = 'scoped memory for tpu_custom_call.1']
  %s0 = inlined_call_operand.vmem [shape: f32[256,8], index: 0, kind: input, shape index: {}]
  %s1 = inlined_call_operand.vmem [shape: f32[256,1], index: 1, kind: input, shape index: {}]
  %s2 = inlined_call_operand.vmem [shape: bf16[8,256], index: 2, kind: input, shape index: {}]
  %s3 = inlined_call_operand.vmem [shape: bf16[256,384], index: 3, kind: input, shape index: {}]
  %s4 = inlined_call_operand.hbm [shape: bf16[256,384], index: 4, kind: input, shape index: {}]
  %s5 = inlined_call_operand.vmem [shape: f32[3,256], index: 5, kind: input, shape index: {}]
  %s6 = inlined_call_operand.vmem [shape: f32[2,384], index: 6, kind: input, shape index: {}]
  %s7 = inlined_call_operand.<no memory space> [shape: f32[1], index: 7, kind: input, shape index: {}]
  %s8 = inlined_call_operand.vmem [shape: f32[256,1], index: 8, kind: output, shape index: {}]
  %s9 = sld [smem:[#allocation0]]
  $region69: #{tpu_custom_call.1} parent=0
    _
  %s11 = ssub.s32 1, %s9
  %s12 = scalar_select 0, %s11, %s9
  %13 = sst [smem:[#allocation2]] %s7
  $region1: #{tpu_custom_call.1} parent=0
    #allocation3 [shape = 'u8[196608]{0}', space=vmem, size = 0x30000, scoped, tag = 'input window, operand 4, single buffered']
    #allocation4 [shape = 's32[2]{0}', space=sflag, size = 0x8, scoped, tag = 'scoped memory for tpu_custom_call.1']
    %14 = vsyncpa [#allocation4], 0
    loop: start=0, step=1, limit=4
    $region2: #{tpu_custom_call.1} parent=1 // loop_pre_header
      _
    $region3: #{tpu_custom_call.1} parent=1 // loop_header
      %s16 = sphi 0, %s20
      %p17 = scmp.ge.s32.totalorder %s16, 4
      %s26 = sphi 0, %s28
      %s29 = sphi 0, %s26
      %s30 = sphi 0, %s29
      %s46 = sphi 0, %s30
      %s52 = sphi 0, %s54
      %s55 = sphi 0, %s52
      %s56 = sphi 0, %s55
      %s72 = sphi 0, %s56
      %s76 = sphi 0, %s76
      %s78 = sphi 0, %s76
      %s79 = sphi 0, %s78
      %s93 = sphi 0, %s79
      %s97 = sphi 0, %s97
      %s99 = sphi 0, %s97
      %s100 = sphi 0, %s99
      %s114 = sphi 0, %s100
      %s118 = sphi 0, %s118
      %s120 = sphi 0, %s118
      %s121 = sphi 0, %s120
      %s135 = sphi 0, %s121
      %s139 = sphi 0, %s139
      %s141 = sphi 0, %s139
      %s142 = sphi 0, %s141
      %s156 = sphi 0, %s142
      %s160 = sphi 0, %s160
      %s162 = sphi 0, %s160
      %s163 = sphi 0, %s162
      %s177 = sphi 0, %s163
      %s181 = sphi 0, %s181
      %s183 = sphi 0, %s181
      %s184 = sphi 0, %s183
      %s198 = sphi 0, %s184
      %s204 = sphi 0, %s206
      %s207 = sphi 0, %s204
      %s208 = sphi 0, %s207
      %s224 = sphi 0, %s208
    $region4: #{tpu_custom_call.1} parent=1 // loop_header_branch
      %19 = sbr.rel (%p17) target = $region8
    $region5: #{tpu_custom_call.1} parent=1 // loop_body
      %s21 = ssub.s32 %s16, 1
      %s22 = ssub.s32 %s16, 2
      %s23 = sadd.s32 %s16, 1
      %s24 = ssub.s32 %s16, %s23
      %p25 = scmp.eq.s32.totalorder %s24, 0
      %s27 = sadd.s32 %s26, 1
      %s28 = scalar_select %p25, %s26, %s27
      %p31 = pneg %p25
      %p32 = scmp.eq.s32.totalorder %s16, 1
      %p33 = por %p31, %p32
      %p34 = scmp.ne.s32.totalorder %s26, %s29
      %p35 = scmp.eq.s32.totalorder %s16, 0
      %p36 = por %p34, %p35
      %p37 = scmp.ne.s32.totalorder %s26, %s29
      %p38 = scmp.eq.s32.totalorder %s21, 1
      %p39 = por %p37, %p38
      %p40 = scmp.ne.s32.totalorder %s29, %s30
      %p41 = scmp.eq.s32.totalorder %s21, 0
      %p42 = por %p40, %p41
      %p43 = scmp.ne.s32.totalorder %s29, %s30
      %p44 = scmp.eq.s32.totalorder %s22, 1
      %p45 = por %p43, %p44
      %p47 = scmp.ne.s32.totalorder %s30, %s46
      %p48 = scmp.eq.s32.totalorder %s22, 0
      %p49 = por %p47, %p48
      %s50 = ssub.s32 %s16, %s23
      %p51 = scmp.eq.s32.totalorder %s50, 0
      %s53 = sadd.s32 %s52, 1
      %s54 = scalar_select %p51, %s52, %s53
      %p57 = pneg %p51
      %p58 = scmp.eq.s32.totalorder %s16, 1
      %p59 = por %p57, %p58
      %p60 = scmp.ne.s32.totalorder %s52, %s55
      %p61 = scmp.eq.s32.totalorder %s16, 0
      %p62 = por %p60, %p61
      %p63 = scmp.ne.s32.totalorder %s52, %s55
      %p64 = scmp.eq.s32.totalorder %s21, 1
      %p65 = por %p63, %p64
      %p66 = scmp.ne.s32.totalorder %s55, %s56
      %p67 = scmp.eq.s32.totalorder %s21, 0
      %p68 = por %p66, %p67
      %p69 = scmp.ne.s32.totalorder %s55, %s56
      %p70 = scmp.eq.s32.totalorder %s22, 1
      %p71 = por %p69, %p70
      %p73 = scmp.ne.s32.totalorder %s56, %s72
      %p74 = scmp.eq.s32.totalorder %s22, 0
      %p75 = por %p73, %p74
      %s77 = sadd.s32 %s76, 1
      %p80 = scmp.eq.s32.totalorder %s16, 1
      %p81 = scmp.ne.s32.totalorder %s76, %s78
      %p82 = scmp.eq.s32.totalorder %s16, 0
      %p83 = por %p81, %p82
      %p84 = scmp.ne.s32.totalorder %s76, %s78
      %p85 = scmp.eq.s32.totalorder %s21, 1
      %p86 = por %p84, %p85
      %p87 = scmp.ne.s32.totalorder %s78, %s79
      %p88 = scmp.eq.s32.totalorder %s21, 0
      %p89 = por %p87, %p88
      %p90 = scmp.ne.s32.totalorder %s78, %s79
      %p91 = scmp.eq.s32.totalorder %s22, 1
      %p92 = por %p90, %p91
      %p94 = scmp.ne.s32.totalorder %s79, %s93
      %p95 = scmp.eq.s32.totalorder %s22, 0
      %p96 = por %p94, %p95
      %s98 = sadd.s32 %s97, 1
      %p101 = scmp.eq.s32.totalorder %s16, 1
      %p102 = scmp.ne.s32.totalorder %s97, %s99
      %p103 = scmp.eq.s32.totalorder %s16, 0
      %p104 = por %p102, %p103
      %p105 = scmp.ne.s32.totalorder %s97, %s99
      %p106 = scmp.eq.s32.totalorder %s21, 1
      %p107 = por %p105, %p106
      %p108 = scmp.ne.s32.totalorder %s99, %s100
      %p109 = scmp.eq.s32.totalorder %s21, 0
      %p110 = por %p108, %p109
      %p111 = scmp.ne.s32.totalorder %s99, %s100
      %p112 = scmp.eq.s32.totalorder %s22, 1
      %p113 = por %p111, %p112
      %p115 = scmp.ne.s32.totalorder %s100, %s114
      %p116 = scmp.eq.s32.totalorder %s22, 0
      %p117 = por %p115, %p116
      %s119 = sadd.s32 %s118, 1
      %p122 = scmp.eq.s32.totalorder %s16, 1
      %p123 = scmp.ne.s32.totalorder %s118, %s120
      %p124 = scmp.eq.s32.totalorder %s16, 0
      %p125 = por %p123, %p124
      %p126 = scmp.ne.s32.totalorder %s118, %s120
      %p127 = scmp.eq.s32.totalorder %s21, 1
      %p128 = por %p126, %p127
      %p129 = scmp.ne.s32.totalorder %s120, %s121
      %p130 = scmp.eq.s32.totalorder %s21, 0
      %p131 = por %p129, %p130
      %p132 = scmp.ne.s32.totalorder %s120, %s121
      %p133 = scmp.eq.s32.totalorder %s22, 1
      %p134 = por %p132, %p133
      %p136 = scmp.ne.s32.totalorder %s121, %s135
      %p137 = scmp.eq.s32.totalorder %s22, 0
      %p138 = por %p136, %p137
      %s140 = sadd.s32 %s139, 1
      %p143 = scmp.eq.s32.totalorder %s16, 1
      %p144 = scmp.ne.s32.totalorder %s139, %s141
      %p145 = scmp.eq.s32.totalorder %s16, 0
      %p146 = por %p144, %p145
      %p147 = scmp.ne.s32.totalorder %s139, %s141
      %p148 = scmp.eq.s32.totalorder %s21, 1
      %p149 = por %p147, %p148
      %p150 = scmp.ne.s32.totalorder %s141, %s142
      %p151 = scmp.eq.s32.totalorder %s21, 0
      %p152 = por %p150, %p151
      %p153 = scmp.ne.s32.totalorder %s141, %s142
      %p154 = scmp.eq.s32.totalorder %s22, 1
      %p155 = por %p153, %p154
      %p157 = scmp.ne.s32.totalorder %s142, %s156
      %p158 = scmp.eq.s32.totalorder %s22, 0
      %p159 = por %p157, %p158
      %s161 = sadd.s32 %s160, 1
      %p164 = scmp.eq.s32.totalorder %s16, 1
      %p165 = scmp.ne.s32.totalorder %s160, %s162
      %p166 = scmp.eq.s32.totalorder %s16, 0
      %p167 = por %p165, %p166
      %p168 = scmp.ne.s32.totalorder %s160, %s162
      %p169 = scmp.eq.s32.totalorder %s21, 1
      %p170 = por %p168, %p169
      %p171 = scmp.ne.s32.totalorder %s162, %s163
      %p172 = scmp.eq.s32.totalorder %s21, 0
      %p173 = por %p171, %p172
      %p174 = scmp.ne.s32.totalorder %s162, %s163
      %p175 = scmp.eq.s32.totalorder %s22, 1
      %p176 = por %p174, %p175
      %p178 = scmp.ne.s32.totalorder %s163, %s177
      %p179 = scmp.eq.s32.totalorder %s22, 0
      %p180 = por %p178, %p179
      %s182 = sadd.s32 %s181, 1
      %p185 = scmp.eq.s32.totalorder %s16, 1
      %p186 = scmp.ne.s32.totalorder %s181, %s183
      %p187 = scmp.eq.s32.totalorder %s16, 0
      %p188 = por %p186, %p187
      %p189 = scmp.ne.s32.totalorder %s181, %s183
      %p190 = scmp.eq.s32.totalorder %s21, 1
      %p191 = por %p189, %p190
      %p192 = scmp.ne.s32.totalorder %s183, %s184
      %p193 = scmp.eq.s32.totalorder %s21, 0
      %p194 = por %p192, %p193
      %p195 = scmp.ne.s32.totalorder %s183, %s184
      %p196 = scmp.eq.s32.totalorder %s22, 1
      %p197 = por %p195, %p196
      %p199 = scmp.ne.s32.totalorder %s184, %s198
      %p200 = scmp.eq.s32.totalorder %s22, 0
      %p201 = por %p199, %p200
      %s202 = ssub.s32 %s16, %s23
      %p203 = scmp.eq.s32.totalorder %s202, 0
      %s205 = sadd.s32 %s204, 1
      %s206 = scalar_select %p203, %s204, %s205
      %p209 = pneg %p203
      %p210 = scmp.eq.s32.totalorder %s16, 1
      %p211 = por %p209, %p210
      %p212 = scmp.ne.s32.totalorder %s204, %s207
      %p213 = scmp.eq.s32.totalorder %s16, 0
      %p214 = por %p212, %p213
      %p215 = scmp.ne.s32.totalorder %s204, %s207
      %p216 = scmp.eq.s32.totalorder %s21, 1
      %p217 = por %p215, %p216
      %p218 = scmp.ne.s32.totalorder %s207, %s208
      %p219 = scmp.eq.s32.totalorder %s21, 0
      %p220 = por %p218, %p219
      %p221 = scmp.ne.s32.totalorder %s207, %s208
      %p222 = scmp.eq.s32.totalorder %s22, 1
      %p223 = por %p221, %p222
      %p225 = scmp.ne.s32.totalorder %s208, %s224
      %p226 = scmp.eq.s32.totalorder %s22, 0
      %p227 = por %p225, %p226
      %p228 = scmp.le.s32.totalorder 1, %s16
      %p229 = scmp.lt.s32.totalorder %s16, 3
      %p230 = pnand %p228, %p229
      %p231 = pneg %p230
      // Predicated region
      $region9: #{tpu_custom_call.1} parent=5 // pred_check
        _
      $region10: #{tpu_custom_call.1} parent=5 // pred_check_branch
        %233 = sbr.rel (%p230) target = $region12
      $region11: #{tpu_custom_call.1} parent=5 // pred_region
        %s234 = ssub.s32 %s16, 1
        // Predicated region
        $region13: #{tpu_custom_call.1} parent=11 // pred_check
          %p235 = pneg %p89
        $region14: #{tpu_custom_call.1} parent=11 // pred_check_branch
          %237 = sbr.rel (%p235) target = $region16
        $region15: #{tpu_custom_call.1} parent=11 // pred_region
          _
        $region16: #{tpu_custom_call.1} parent=11 // pred_fallthru
          _
        // Predicated region
        $region17: #{tpu_custom_call.1} parent=11 // pred_check
          %p238 = pneg %p110
        $region18: #{tpu_custom_call.1} parent=11 // pred_check_branch
          %240 = sbr.rel (%p238) target = $region20
        $region19: #{tpu_custom_call.1} parent=11 // pred_region
          _
        $region20: #{tpu_custom_call.1} parent=11 // pred_fallthru
          _
        // Predicated region
        $region21: #{tpu_custom_call.1} parent=11 // pred_check
          %p241 = pneg %p131
        $region22: #{tpu_custom_call.1} parent=11 // pred_check_branch
          %243 = sbr.rel (%p241) target = $region24
        $region23: #{tpu_custom_call.1} parent=11 // pred_region
          %245 = vsyncadd [#allocation4], 0
          %s246 = sshll.u32 %s4, 4
          %s247 = int_to_ptr.hbm [resolvable:$true] %s246
          %s248 = sshll.u32 [#allocation3], 4
          %s249 = int_to_ptr.vmem [resolvable:$true] %s248
          %254 = dma.hbm_to_vmem [thread:$0]  %s247, 6144, %s249, [#allocation4], 192, 192, 12
        $region24: #{tpu_custom_call.1} parent=11 // pred_fallthru
          _
        // Predicated region
        $region25: #{tpu_custom_call.1} parent=11 // pred_check
          %p255 = pneg %p152
        $region26: #{tpu_custom_call.1} parent=11 // pred_check_branch
          %257 = sbr.rel (%p255) target = $region28
        $region27: #{tpu_custom_call.1} parent=11 // pred_region
          _
        $region28: #{tpu_custom_call.1} parent=11 // pred_fallthru
          _
        // Predicated region
        $region29: #{tpu_custom_call.1} parent=11 // pred_check
          %p258 = pneg %p173
        $region30: #{tpu_custom_call.1} parent=11 // pred_check_branch
          %260 = sbr.rel (%p258) target = $region32
        $region31: #{tpu_custom_call.1} parent=11 // pred_region
          _
        $region32: #{tpu_custom_call.1} parent=11 // pred_fallthru
          _
        // Predicated region
        $region33: #{tpu_custom_call.1} parent=11 // pred_check
          %p261 = pneg %p194
        $region34: #{tpu_custom_call.1} parent=11 // pred_check_branch
          %263 = sbr.rel (%p261) target = $region36
        $region35: #{tpu_custom_call.1} parent=11 // pred_region
          _
        $region36: #{tpu_custom_call.1} parent=11 // pred_fallthru
          _
      $region12: #{tpu_custom_call.1} parent=5 // pred_fallthru
        _
      %p264 = scmp.lt.s32.totalorder %s16, 2
      // Predicated region
      $region37: #{tpu_custom_call.1} parent=5 // pred_check
        %p265 = pneg %p264
      $region38: #{tpu_custom_call.1} parent=5 // pred_check_branch
        %267 = sbr.rel (%p265) target = $region40
      $region39: #{tpu_custom_call.1} parent=5 // pred_region
        // Predicated region
        $region41: #{tpu_custom_call.1} parent=39 // pred_check
          %p268 = pneg %p36
        $region42: #{tpu_custom_call.1} parent=39 // pred_check_branch
          %270 = sbr.rel (%p268) target = $region44
        $region43: #{tpu_custom_call.1} parent=39 // pred_region
          %s271 = smul.u32 16, %s16
          %p272 = scmp.lt.s32.totalorder %s271, 31
          %s273 = scalar_select %p272, %s271, 31
          %s274 = smul.addr %s273, 8
          %s275 = scalar_lea.vmem %s0, %s274
          %s276 = smul.u32 16, %s16
        $region44: #{tpu_custom_call.1} parent=39 // pred_fallthru
          _
        // Predicated region
        $region45: #{tpu_custom_call.1} parent=39 // pred_check
          %p277 = pneg %p62
        $region46: #{tpu_custom_call.1} parent=39 // pred_check_branch
          %279 = sbr.rel (%p277) target = $region48
        $region47: #{tpu_custom_call.1} parent=39 // pred_region
          %s280 = smul.u32 16, %s16
          %p281 = scmp.lt.s32.totalorder %s280, 31
          %s282 = scalar_select %p281, %s280, 31
          %s283 = smul.addr %s282, 8
          %s284 = scalar_lea.vmem %s1, %s283
          %s285 = smul.u32 16, %s16
        $region48: #{tpu_custom_call.1} parent=39 // pred_fallthru
          _
      $region40: #{tpu_custom_call.1} parent=5 // pred_fallthru
        _
      %p286 = scmp.le.s32.totalorder 1, %s16
      %p287 = scmp.lt.s32.totalorder %s16, 3
      %p288 = pnand %p286, %p287
      %p289 = pneg %p288
      // Predicated region
      $region49: #{tpu_custom_call.1} parent=5 // pred_check
        _
      $region50: #{tpu_custom_call.1} parent=5 // pred_check_branch
        %291 = sbr.rel (%p288) target = $region52
      $region51: #{tpu_custom_call.1} parent=5 // pred_region
        %s292 = ssub.s32 %s16, 1
        // Predicated region
        $region53: #{tpu_custom_call.1} parent=51 // pred_check
          %p293 = pneg %p131
        $region54: #{tpu_custom_call.1} parent=51 // pred_check_branch
          %295 = sbr.rel (%p293) target = $region56
        $region55: #{tpu_custom_call.1} parent=51 // pred_region
          %297 = dma.done [#allocation4], 6144
        $region56: #{tpu_custom_call.1} parent=51 // pred_fallthru
          _
        %s298 = smul.u32 16, %s21
        %p299 = scmp.lt.s32.totalorder %s298, 31
        %s300 = scalar_select %p299, %s298, 31
        %s301 = smul.addr %s300, 8
        %s302 = scalar_lea.vmem %s0, %s301
        %p303 = pneg %p42
        %p304 = pneg %p39
        %s305 = smul.u32 16, %s21
        %p306 = scmp.lt.s32.totalorder %s305, 31
        %s307 = scalar_select %p306, %s305, 31
        %s308 = smul.addr %s307, 8
        %s309 = scalar_lea.vmem %s1, %s308
        %p310 = pneg %p68
        %p311 = pneg %p65
        %p312 = pneg %p89
        %p313 = pneg %p86
        %p314 = pneg %p110
        %p315 = pneg %p107
        %p316 = pneg %p131
        %p317 = pneg %p128
        %p318 = pneg %p152
        %p319 = pneg %p149
        %p320 = pneg %p173
        %p321 = pneg %p170
        %p322 = pneg %p194
        %p323 = pneg %p191
        %p324 = pneg %p220
        %p325 = pneg %p217
        %s326 = smul.u32 16, %s21
        %p327 = scmp.lt.s32.totalorder %s326, 31
        %s328 = scalar_select %p327, %s326, 31
        %s329 = smul.addr %s328, 8
        %s330 = scalar_lea.vmem %s8, %s329
        %s331 = smul.u32 16, %s21
        %p332 = scmp.lt.s32.totalorder %s331, 31
        %s333 = scalar_select %p332, %s331, 31
        %s334 = smul.addr %s333, 8
        %s335 = scalar_lea.vmem %s0, %s334
        %s336 = smul.u32 16, %s21
        %s337 = smul.u32 16, %s21
        %p338 = scmp.lt.s32.totalorder %s337, 31
        %s339 = scalar_select %p338, %s337, 31
        %s340 = smul.addr %s339, 8
        %s341 = scalar_lea.vmem %s1, %s340
        %s342 = smul.u32 16, %s21
        %s343 = smul.u32 16, %s21
        %p344 = scmp.lt.s32.totalorder %s343, 31
        %s345 = scalar_select %p344, %s343, 31
        %s346 = smul.addr %s345, 8
        %s347 = scalar_lea.vmem %s8, %s346
        %s348 = smul.u32 16, %s21
        %v350 = vld [vmem:[%s5] ss:$4 sm:$0x3]
        %s351 = scalar_lea.vmem %s5, 1
        %v352 = vld [vmem:[%s351] ss:$4 sm:$0x3]
        %s353 = scalar_lea.vmem %s5, 2
        %v354 = vld [vmem:[%s353] ss:$4 sm:$0x3]
        %v355 = vld [vmem:[%s6] ss:$2 sm:$0x7]
        %s356 = scalar_lea.vmem %s6, 1
        %v357 = vld [vmem:[%s356] ss:$2 sm:$0x7]
        %v358 = vld [vmem:[%s335] sm:$0xff]
        %v359 = vld [vmem:[%s335 + $0x8] sm:$0xff]
        %v360 = vld [vmem:[%s335 + $0x10] sm:$0xff]
        %v361 = vld [vmem:[%s335 + $0x18] sm:$0xff]
        %v362 = vld [vmem:[%s335 + $0x20] sm:$0xff]
        %v363 = vld [vmem:[%s335 + $0x28] sm:$0xff]
        %v364 = vld [vmem:[%s335 + $0x30] sm:$0xff]
        %v365 = vld [vmem:[%s335 + $0x38] sm:$0xff]
        %v366 = vld [vmem:[%s335 + $0x40] sm:$0xff]
        %v367 = vld [vmem:[%s335 + $0x48] sm:$0xff]
        %v368 = vld [vmem:[%s335 + $0x50] sm:$0xff]
        %v369 = vld [vmem:[%s335 + $0x58] sm:$0xff]
        %v370 = vld [vmem:[%s335 + $0x60] sm:$0xff]
        %v371 = vld [vmem:[%s335 + $0x68] sm:$0xff]
        %v372 = vld [vmem:[%s335 + $0x70] sm:$0xff]
        %v373 = vld [vmem:[%s335 + $0x78] sm:$0xff]
        %v374 = vpack.c.bf16 %v359, %v358
        %v375 = vpack.c.bf16 %v361, %v360
        %v376 = vpack.c.bf16 %v363, %v362
        %v377 = vpack.c.bf16 %v365, %v364
        %v378 = vpack.c.bf16 %v367, %v366
        %v379 = vpack.c.bf16 %v369, %v368
        %v380 = vpack.c.bf16 %v371, %v370
        %v381 = vpack.c.bf16 %v373, %v372
        %v382 = vld [vmem:[%s2] sm:$0xff]
        %v384 = vperm.slane %v350, 0
        %v385 = vperm.slane %v350, 1
        %v389 = vunpack.c.l.b16 %v382
        %v390 = vunpack.c.h.b16 %v382
        %v391 = vpack.c.b16 %v389, %v389
        %v392 = vpack.c.b16 %v390, %v390
        %vm393 = vcmask 64512
        %v395 = vsel %vm393, %v374, 0
        %v398 = vsel %vm393, %v375, 0
        %v401 = vsel %vm393, %v376, 0
        %v404 = vsel %vm393, %v377, 0
        %v407 = vsel %vm393, %v378, 0
        %v410 = vsel %vm393, %v379, 0
        %v413 = vsel %vm393, %v380, 0
        %v416 = vsel %vm393, %v381, 0
        %vm418 = vcmask 1043456
        %v420 = vsel %vm418, %v391, 0
        %v423 = vsel %vm418, %v392, 0
        %425 = vmatpush.bf16.msra.mxu0 0
        %426 = vmatpush.bf16.msra.mxu0 0
        %427 = vmatpush.bf16.msra.mxu0 0
        %428 = vmatpush.bf16.msra.mxu0 0
        %429 = vmatpush.bf16.msra.mxu0 0
        %430 = vmatpush.bf16.msra.mxu0 0
        %431 = vmatpush.bf16.msra.mxu0 0
        %432 = vmatpush.bf16.msra.mxu0 %v420
        %433 = vmatmul.bf16.gmra.mxu0 %v395
        %v434 = vpop.f32.mrf.mxu0
        %v435 = vadd.f32 %v384, %v434
        %v436 = vpop.f32.mrf.mxu0
        %v437 = vadd.f32 %v384, %v436
        %438 = vmatmul.bf16.gmra.mxu0 %v398
        %v439 = vpop.f32.mrf.mxu0
        %v440 = vadd.f32 %v384, %v439
        %v441 = vpop.f32.mrf.mxu0
        %v442 = vadd.f32 %v384, %v441
        %443 = vmatmul.bf16.gmra.mxu0 %v401
        %v444 = vpop.f32.mrf.mxu0
        %v445 = vadd.f32 %v384, %v444
        %v446 = vpop.f32.mrf.mxu0
        %v447 = vadd.f32 %v384, %v446
        %448 = vmatmul.bf16.gmra.mxu0 %v404
        %v449 = vpop.f32.mrf.mxu0
        %v450 = vadd.f32 %v384, %v449
        %v451 = vpop.f32.mrf.mxu0
        %v452 = vadd.f32 %v384, %v451
        %453 = vmatmul.bf16.gmra.mxu0 %v407
        %v454 = vpop.f32.mrf.mxu0
        %v455 = vadd.f32 %v384, %v454
        %v456 = vpop.f32.mrf.mxu0
        %v457 = vadd.f32 %v384, %v456
        %458 = vmatmul.bf16.gmra.mxu0 %v410
        %v459 = vpop.f32.mrf.mxu0
        %v460 = vadd.f32 %v384, %v459
        %v461 = vpop.f32.mrf.mxu0
        %v462 = vadd.f32 %v384, %v461
        %463 = vmatmul.bf16.gmra.mxu0 %v413
        %v464 = vpop.f32.mrf.mxu0
        %v465 = vadd.f32 %v384, %v464
        %v466 = vpop.f32.mrf.mxu0
        %v467 = vadd.f32 %v384, %v466
        %468 = vmatmul.bf16.gmra.mxu0 %v416
        %v469 = vpop.f32.mrf.mxu0
        %v470 = vadd.f32 %v384, %v469
        %v471 = vpop.f32.mrf.mxu0
        %v472 = vadd.f32 %v384, %v471
        %473 = vdwg.mxu0
        %474 = vmatpush.bf16.msra.mxu0 0
        %475 = vmatpush.bf16.msra.mxu0 0
        %476 = vmatpush.bf16.msra.mxu0 0
        %477 = vmatpush.bf16.msra.mxu0 0
        %478 = vmatpush.bf16.msra.mxu0 0
        %479 = vmatpush.bf16.msra.mxu0 0
        %480 = vmatpush.bf16.msra.mxu0 0
        %481 = vmatpush.bf16.msra.mxu0 %v423
        %482 = vmatmul.bf16.gmra.mxu0 %v395
        %v483 = vpop.f32.mrf.mxu0
        %v484 = vadd.f32 %v385, %v483
        %v485 = vpop.f32.mrf.mxu0
        %v486 = vadd.f32 %v385, %v485
        %487 = vmatmul.bf16.gmra.mxu0 %v398
        %v488 = vpop.f32.mrf.mxu0
        %v489 = vadd.f32 %v385, %v488
        %v490 = vpop.f32.mrf.mxu0
        %v491 = vadd.f32 %v385, %v490
        %492 = vmatmul.bf16.gmra.mxu0 %v401
        %v493 = vpop.f32.mrf.mxu0
        %v494 = vadd.f32 %v385, %v493
        %v495 = vpop.f32.mrf.mxu0
        %v496 = vadd.f32 %v385, %v495
        %497 = vmatmul.bf16.gmra.mxu0 %v404
        %v498 = vpop.f32.mrf.mxu0
        %v499 = vadd.f32 %v385, %v498
        %v500 = vpop.f32.mrf.mxu0
        %v501 = vadd.f32 %v385, %v500
        %502 = vmatmul.bf16.gmra.mxu0 %v407
        %v503 = vpop.f32.mrf.mxu0
        %v504 = vadd.f32 %v385, %v503
        %v505 = vpop.f32.mrf.mxu0
        %v506 = vadd.f32 %v385, %v505
        %507 = vmatmul.bf16.gmra.mxu0 %v410
        %v508 = vpop.f32.mrf.mxu0
        %v509 = vadd.f32 %v385, %v508
        %v510 = vpop.f32.mrf.mxu0
        %v511 = vadd.f32 %v385, %v510
        %512 = vmatmul.bf16.gmra.mxu0 %v413
        %v513 = vpop.f32.mrf.mxu0
        %v514 = vadd.f32 %v385, %v513
        %v515 = vpop.f32.mrf.mxu0
        %v516 = vadd.f32 %v385, %v515
        %517 = vmatmul.bf16.gmra.mxu0 %v416
        %v518 = vpop.f32.mrf.mxu0
        %v519 = vadd.f32 %v385, %v518
        %v520 = vpop.f32.mrf.mxu0
        %v521 = vadd.f32 %v385, %v520
        %522 = vdwg.mxu0
        %v523 = vmax.f32 %v435, 0.0
        %v524 = vmax.f32 %v484, 0.0
        %v525 = vmax.f32 %v437, 0.0
        %v526 = vmax.f32 %v486, 0.0
        %v527 = vmax.f32 %v440, 0.0
        %v528 = vmax.f32 %v489, 0.0
        %v529 = vmax.f32 %v442, 0.0
        %v530 = vmax.f32 %v491, 0.0
        %v531 = vmax.f32 %v445, 0.0
        %v532 = vmax.f32 %v494, 0.0
        %v533 = vmax.f32 %v447, 0.0
        %v534 = vmax.f32 %v496, 0.0
        %v535 = vmax.f32 %v450, 0.0
        %v536 = vmax.f32 %v499, 0.0
        %v537 = vmax.f32 %v452, 0.0
        %v538 = vmax.f32 %v501, 0.0
        %v539 = vmax.f32 %v455, 0.0
        %v540 = vmax.f32 %v504, 0.0
        %v541 = vmax.f32 %v457, 0.0
        %v542 = vmax.f32 %v506, 0.0
        %v543 = vmax.f32 %v460, 0.0
        %v544 = vmax.f32 %v509, 0.0
        %v545 = vmax.f32 %v462, 0.0
        %v546 = vmax.f32 %v511, 0.0
        %v547 = vmax.f32 %v465, 0.0
        %v548 = vmax.f32 %v514, 0.0
        %v549 = vmax.f32 %v467, 0.0
        %v550 = vmax.f32 %v516, 0.0
        %v551 = vmax.f32 %v470, 0.0
        %v552 = vmax.f32 %v519, 0.0
        %v553 = vmax.f32 %v472, 0.0
        %v554 = vmax.f32 %v521, 0.0
        %v555 = vld [vmem:[%s341] sm:$0xff]
        %v556 = vld [vmem:[%s341 + $0x8] sm:$0xff]
        %v557 = vld [vmem:[%s341 + $0x10] sm:$0xff]
        %v558 = vld [vmem:[%s341 + $0x18] sm:$0xff]
        %v559 = vld [vmem:[%s341 + $0x20] sm:$0xff]
        %v560 = vld [vmem:[%s341 + $0x28] sm:$0xff]
        %v561 = vld [vmem:[%s341 + $0x30] sm:$0xff]
        %v562 = vld [vmem:[%s341 + $0x38] sm:$0xff]
        %v563 = vld [vmem:[%s341 + $0x40] sm:$0xff]
        %v564 = vld [vmem:[%s341 + $0x48] sm:$0xff]
        %v565 = vld [vmem:[%s341 + $0x50] sm:$0xff]
        %v566 = vld [vmem:[%s341 + $0x58] sm:$0xff]
        %v567 = vld [vmem:[%s341 + $0x60] sm:$0xff]
        %v568 = vld [vmem:[%s341 + $0x68] sm:$0xff]
        %v569 = vld [vmem:[%s341 + $0x70] sm:$0xff]
        %v570 = vld [vmem:[%s341 + $0x78] sm:$0xff]
        %572 = vset.pattern.permute.xlu0 0
        %573 = vperm.xlu0 %572, %v555
        %v574 = vpop.permute.xlu0 %573
        %577 = vset.pattern.permute.xlu0 0
        %578 = vperm.xlu0 %577, %v556
        %v579 = vpop.permute.xlu0 %578
        %582 = vset.pattern.permute.xlu0 0
        %583 = vperm.xlu0 %582, %v557
        %v584 = vpop.permute.xlu0 %583
        %587 = vset.pattern.permute.xlu0 0
        %588 = vperm.xlu0 %587, %v558
        %v589 = vpop.permute.xlu0 %588
        %592 = vset.pattern.permute.xlu0 0
        %593 = vperm.xlu0 %592, %v559
        %v594 = vpop.permute.xlu0 %593
        %597 = vset.pattern.permute.xlu0 0
        %598 = vperm.xlu0 %597, %v560
        %v599 = vpop.permute.xlu0 %598
        %602 = vset.pattern.permute.xlu0 0
        %603 = vperm.xlu0 %602, %v561
        %v604 = vpop.permute.xlu0 %603
        %607 = vset.pattern.permute.xlu0 0
        %608 = vperm.xlu0 %607, %v562
        %v609 = vpop.permute.xlu0 %608
        %612 = vset.pattern.permute.xlu0 0
        %613 = vperm.xlu0 %612, %v563
        %v614 = vpop.permute.xlu0 %613
        %617 = vset.pattern.permute.xlu0 0
        %618 = vperm.xlu0 %617, %v564
        %v619 = vpop.permute.xlu0 %618
        %622 = vset.pattern.permute.xlu0 0
        %623 = vperm.xlu0 %622, %v565
        %v624 = vpop.permute.xlu0 %623
        %627 = vset.pattern.permute.xlu0 0
        %628 = vperm.xlu0 %627, %v566
        %v629 = vpop.permute.xlu0 %628
        %632 = vset.pattern.permute.xlu0 0
        %633 = vperm.xlu0 %632, %v567
        %v634 = vpop.permute.xlu0 %633
        %637 = vset.pattern.permute.xlu0 0
        %638 = vperm.xlu0 %637, %v568
        %v639 = vpop.permute.xlu0 %638
        %642 = vset.pattern.permute.xlu0 0
        %643 = vperm.xlu0 %642, %v569
        %v644 = vpop.permute.xlu0 %643
        %647 = vset.pattern.permute.xlu0 0
        %648 = vperm.xlu0 %647, %v570
        %v649 = vpop.permute.xlu0 %648
        %v652 = vperm.slane %v354, 0
        %v653 = vperm.slane %v354, 1
        %v656 = vmul.f32 %v574, %v652
        %v657 = vmul.f32 %v574, %v653
        %v658 = vmul.f32 %v579, %v652
        %v659 = vmul.f32 %v579, %v653
        %v660 = vmul.f32 %v584, %v652
        %v661 = vmul.f32 %v584, %v653
        %v662 = vmul.f32 %v589, %v652
        %v663 = vmul.f32 %v589, %v653
        %v664 = vmul.f32 %v594, %v652
        %v665 = vmul.f32 %v594, %v653
        %v666 = vmul.f32 %v599, %v652
        %v667 = vmul.f32 %v599, %v653
        %v668 = vmul.f32 %v604, %v652
        %v669 = vmul.f32 %v604, %v653
        %v670 = vmul.f32 %v609, %v652
        %v671 = vmul.f32 %v609, %v653
        %v672 = vmul.f32 %v614, %v652
        %v673 = vmul.f32 %v614, %v653
        %v674 = vmul.f32 %v619, %v652
        %v675 = vmul.f32 %v619, %v653
        %v676 = vmul.f32 %v624, %v652
        %v677 = vmul.f32 %v624, %v653
        %v678 = vmul.f32 %v629, %v652
        %v679 = vmul.f32 %v629, %v653
        %v680 = vmul.f32 %v634, %v652
        %v681 = vmul.f32 %v634, %v653
        %v682 = vmul.f32 %v639, %v652
        %v683 = vmul.f32 %v639, %v653
        %v684 = vmul.f32 %v644, %v652
        %v685 = vmul.f32 %v644, %v653
        %v686 = vmul.f32 %v649, %v652
        %v687 = vmul.f32 %v649, %v653
        %v689 = vperm.slane %v352, 0
        %v690 = vperm.slane %v352, 1
        %v693 = vadd.f32 %v656, %v689
        %v694 = vadd.f32 %v657, %v690
        %v695 = vadd.f32 %v658, %v689
        %v696 = vadd.f32 %v659, %v690
        %v697 = vadd.f32 %v660, %v689
        %v698 = vadd.f32 %v661, %v690
        %v699 = vadd.f32 %v662, %v689
        %v700 = vadd.f32 %v663, %v690
        %v701 = vadd.f32 %v664, %v689
        %v702 = vadd.f32 %v665, %v690
        %v703 = vadd.f32 %v666, %v689
        %v704 = vadd.f32 %v667, %v690
        %v705 = vadd.f32 %v668, %v689
        %v706 = vadd.f32 %v669, %v690
        %v707 = vadd.f32 %v670, %v689
        %v708 = vadd.f32 %v671, %v690
        %v709 = vadd.f32 %v672, %v689
        %v710 = vadd.f32 %v673, %v690
        %v711 = vadd.f32 %v674, %v689
        %v712 = vadd.f32 %v675, %v690
        %v713 = vadd.f32 %v676, %v689
        %v714 = vadd.f32 %v677, %v690
        %v715 = vadd.f32 %v678, %v689
        %v716 = vadd.f32 %v679, %v690
        %v717 = vadd.f32 %v680, %v689
        %v718 = vadd.f32 %v681, %v690
        %v719 = vadd.f32 %v682, %v689
        %v720 = vadd.f32 %v683, %v690
        %v721 = vadd.f32 %v684, %v689
        %v722 = vadd.f32 %v685, %v690
        %v723 = vadd.f32 %v686, %v689
        %v724 = vadd.f32 %v687, %v690
        %v725 = vmax.f32 %v693, 0.0
        %v726 = vmax.f32 %v694, 0.0
        %v727 = vmax.f32 %v695, 0.0
        %v728 = vmax.f32 %v696, 0.0
        %v729 = vmax.f32 %v697, 0.0
        %v730 = vmax.f32 %v698, 0.0
        %v731 = vmax.f32 %v699, 0.0
        %v732 = vmax.f32 %v700, 0.0
        %v733 = vmax.f32 %v701, 0.0
        %v734 = vmax.f32 %v702, 0.0
        %v735 = vmax.f32 %v703, 0.0
        %v736 = vmax.f32 %v704, 0.0
        %v737 = vmax.f32 %v705, 0.0
        %v738 = vmax.f32 %v706, 0.0
        %v739 = vmax.f32 %v707, 0.0
        %v740 = vmax.f32 %v708, 0.0
        %v741 = vmax.f32 %v709, 0.0
        %v742 = vmax.f32 %v710, 0.0
        %v743 = vmax.f32 %v711, 0.0
        %v744 = vmax.f32 %v712, 0.0
        %v745 = vmax.f32 %v713, 0.0
        %v746 = vmax.f32 %v714, 0.0
        %v747 = vmax.f32 %v715, 0.0
        %v748 = vmax.f32 %v716, 0.0
        %v749 = vmax.f32 %v717, 0.0
        %v750 = vmax.f32 %v718, 0.0
        %v751 = vmax.f32 %v719, 0.0
        %v752 = vmax.f32 %v720, 0.0
        %v753 = vmax.f32 %v721, 0.0
        %v754 = vmax.f32 %v722, 0.0
        %v755 = vmax.f32 %v723, 0.0
        %v756 = vmax.f32 %v724, 0.0
        %v757 = vpack.c.bf16 %v525, %v523
        %v758 = vpack.c.bf16 %v526, %v524
        %v759 = vpack.c.bf16 %v529, %v527
        %v760 = vpack.c.bf16 %v530, %v528
        %v761 = vpack.c.bf16 %v533, %v531
        %v762 = vpack.c.bf16 %v534, %v532
        %v763 = vpack.c.bf16 %v537, %v535
        %v764 = vpack.c.bf16 %v538, %v536
        %v765 = vpack.c.bf16 %v541, %v539
        %v766 = vpack.c.bf16 %v542, %v540
        %v767 = vpack.c.bf16 %v545, %v543
        %v768 = vpack.c.bf16 %v546, %v544
        %v769 = vpack.c.bf16 %v549, %v547
        %v770 = vpack.c.bf16 %v550, %v548
        %v771 = vpack.c.bf16 %v553, %v551
        %v772 = vpack.c.bf16 %v554, %v552
        %v773 = vld [vmem:[%s3] sm:$0xff]
        %v774 = vld [vmem:[%s3 + $0x8] sm:$0xf]
        %v775 = vld [vmem:[%s3 + $0xc] sm:$0xff]
        %v776 = vld [vmem:[%s3 + $0x14] sm:$0xf]
        %v777 = vld [vmem:[%s3 + $0x18] sm:$0xff]
        %v778 = vld [vmem:[%s3 + $0x20] sm:$0xf]
        %v779 = vld [vmem:[%s3 + $0x24] sm:$0xff]
        %v780 = vld [vmem:[%s3 + $0x2c] sm:$0xf]
        %v781 = vld [vmem:[%s3 + $0x30] sm:$0xff]
        %v782 = vld [vmem:[%s3 + $0x38] sm:$0xf]
        %v783 = vld [vmem:[%s3 + $0x3c] sm:$0xff]
        %v784 = vld [vmem:[%s3 + $0x44] sm:$0xf]
        %v785 = vld [vmem:[%s3 + $0x48] sm:$0xff]
        %v786 = vld [vmem:[%s3 + $0x50] sm:$0xf]
        %v787 = vld [vmem:[%s3 + $0x54] sm:$0xff]
        %v788 = vld [vmem:[%s3 + $0x5c] sm:$0xf]
        %v789 = vld [vmem:[%s3 + $0x60] sm:$0xff]
        %v790 = vld [vmem:[%s3 + $0x68] sm:$0xf]
        %v791 = vld [vmem:[%s3 + $0x6c] sm:$0xff]
        %v792 = vld [vmem:[%s3 + $0x74] sm:$0xf]
        %v793 = vld [vmem:[%s3 + $0x78] sm:$0xff]
        %v794 = vld [vmem:[%s3 + $0x80] sm:$0xf]
        %v795 = vld [vmem:[%s3 + $0x84] sm:$0xff]
        %v796 = vld [vmem:[%s3 + $0x8c] sm:$0xf]
        %v797 = vld [vmem:[%s3 + $0x90] sm:$0xff]
        %v798 = vld [vmem:[%s3 + $0x98] sm:$0xf]
        %v799 = vld [vmem:[%s3 + $0x9c] sm:$0xff]
        %v800 = vld [vmem:[%s3 + $0xa4] sm:$0xf]
        %v801 = vld [vmem:[%s3 + $0xa8] sm:$0xff]
        %v802 = vld [vmem:[%s3 + $0xb0] sm:$0xf]
        %v803 = vld [vmem:[%s3 + $0xb4] sm:$0xff]
        %v804 = vld [vmem:[%s3 + $0xbc] sm:$0xf]
        %v805 = vld [vmem:[%s3 + $0xc0] sm:$0xff]
        %v806 = vld [vmem:[%s3 + $0xc8] sm:$0xf]
        %v807 = vld [vmem:[%s3 + $0xcc] sm:$0xff]
        %v808 = vld [vmem:[%s3 + $0xd4] sm:$0xf]
        %v809 = vld [vmem:[%s3 + $0xd8] sm:$0xff]
        %v810 = vld [vmem:[%s3 + $0xe0] sm:$0xf]
        %v811 = vld [vmem:[%s3 + $0xe4] sm:$0xff]
        %v812 = vld [vmem:[%s3 + $0xec] sm:$0xf]
        %v813 = vld [vmem:[%s3 + $0xf0] sm:$0xff]
        %v814 = vld [vmem:[%s3 + $0xf8] sm:$0xf]
        %v815 = vld [vmem:[%s3 + $0xfc] sm:$0xff]
        %v816 = vld [vmem:[%s3 + $0x104] sm:$0xf]
        %v817 = vld [vmem:[%s3 + $0x108] sm:$0xff]
        %v818 = vld [vmem:[%s3 + $0x110] sm:$0xf]
        %v819 = vld [vmem:[%s3 + $0x114] sm:$0xff]
        %v820 = vld [vmem:[%s3 + $0x11c] sm:$0xf]
        %v821 = vld [vmem:[%s3 + $0x120] sm:$0xff]
        %v822 = vld [vmem:[%s3 + $0x128] sm:$0xf]
        %v823 = vld [vmem:[%s3 + $0x12c] sm:$0xff]
        %v824 = vld [vmem:[%s3 + $0x134] sm:$0xf]
        %v825 = vld [vmem:[%s3 + $0x138] sm:$0xff]
        %v826 = vld [vmem:[%s3 + $0x140] sm:$0xf]
        %v827 = vld [vmem:[%s3 + $0x144] sm:$0xff]
        %v828 = vld [vmem:[%s3 + $0x14c] sm:$0xf]
        %v829 = vld [vmem:[%s3 + $0x150] sm:$0xff]
        %v830 = vld [vmem:[%s3 + $0x158] sm:$0xf]
        %v831 = vld [vmem:[%s3 + $0x15c] sm:$0xff]
        %v832 = vld [vmem:[%s3 + $0x164] sm:$0xf]
        %v833 = vld [vmem:[%s3 + $0x168] sm:$0xff]
        %v834 = vld [vmem:[%s3 + $0x170] sm:$0xf]
        %v835 = vld [vmem:[%s3 + $0x174] sm:$0xff]
        %v836 = vld [vmem:[%s3 + $0x17c] sm:$0xf]
        %v837 = vpack.c.bf16 %v727, %v725
        %v838 = vpack.c.bf16 %v728, %v726
        %v839 = vpack.c.bf16 %v731, %v729
        %v840 = vpack.c.bf16 %v732, %v730
        %v841 = vpack.c.bf16 %v735, %v733
        %v842 = vpack.c.bf16 %v736, %v734
        %v843 = vpack.c.bf16 %v739, %v737
        %v844 = vpack.c.bf16 %v740, %v738
        %v845 = vpack.c.bf16 %v743, %v741
        %v846 = vpack.c.bf16 %v744, %v742
        %v847 = vpack.c.bf16 %v747, %v745
        %v848 = vpack.c.bf16 %v748, %v746
        %v849 = vpack.c.bf16 %v751, %v749
        %v850 = vpack.c.bf16 %v752, %v750
        %v851 = vpack.c.bf16 %v755, %v753
        %v852 = vpack.c.bf16 %v756, %v754
        %v853 = vld [vmem:[#allocation3] sm:$0xff]
        %v854 = vld [vmem:[#allocation3 + $0x8] sm:$0xf]
        %v855 = vld [vmem:[#allocation3 + $0xc] sm:$0xff]
        %v856 = vld [vmem:[#allocation3 + $0x14] sm:$0xf]
        %v857 = vld [vmem:[#allocation3 + $0x18] sm:$0xff]
        %v858 = vld [vmem:[#allocation3 + $0x20] sm:$0xf]
        %v859 = vld [vmem:[#allocation3 + $0x24] sm:$0xff]
        %v860 = vld [vmem:[#allocation3 + $0x2c] sm:$0xf]
        %v861 = vld [vmem:[#allocation3 + $0x30] sm:$0xff]
        %v862 = vld [vmem:[#allocation3 + $0x38] sm:$0xf]
        %v863 = vld [vmem:[#allocation3 + $0x3c] sm:$0xff]
        %v864 = vld [vmem:[#allocation3 + $0x44] sm:$0xf]
        %v865 = vld [vmem:[#allocation3 + $0x48] sm:$0xff]
        %v866 = vld [vmem:[#allocation3 + $0x50] sm:$0xf]
        %v867 = vld [vmem:[#allocation3 + $0x54] sm:$0xff]
        %v868 = vld [vmem:[#allocation3 + $0x5c] sm:$0xf]
        %v869 = vld [vmem:[#allocation3 + $0x60] sm:$0xff]
        %v870 = vld [vmem:[#allocation3 + $0x68] sm:$0xf]
        %v871 = vld [vmem:[#allocation3 + $0x6c] sm:$0xff]
        %v872 = vld [vmem:[#allocation3 + $0x74] sm:$0xf]
        %v873 = vld [vmem:[#allocation3 + $0x78] sm:$0xff]
        %v874 = vld [vmem:[#allocation3 + $0x80] sm:$0xf]
        %v875 = vld [vmem:[#allocation3 + $0x84] sm:$0xff]
        %v876 = vld [vmem:[#allocation3 + $0x8c] sm:$0xf]
        %v877 = vld [vmem:[#allocation3 + $0x90] sm:$0xff]
        %v878 = vld [vmem:[#allocation3 + $0x98] sm:$0xf]
        %v879 = vld [vmem:[#allocation3 + $0x9c] sm:$0xff]
        %v880 = vld [vmem:[#allocation3 + $0xa4] sm:$0xf]
        %v881 = vld [vmem:[#allocation3 + $0xa8] sm:$0xff]
        %v882 = vld [vmem:[#allocation3 + $0xb0] sm:$0xf]
        %v883 = vld [vmem:[#allocation3 + $0xb4] sm:$0xff]
        %v884 = vld [vmem:[#allocation3 + $0xbc] sm:$0xf]
        %v885 = vld [vmem:[#allocation3 + $0xc0] sm:$0xff]
        %v886 = vld [vmem:[#allocation3 + $0xc8] sm:$0xf]
        %v887 = vld [vmem:[#allocation3 + $0xcc] sm:$0xff]
        %v888 = vld [vmem:[#allocation3 + $0xd4] sm:$0xf]
        %v889 = vld [vmem:[#allocation3 + $0xd8] sm:$0xff]
        %v890 = vld [vmem:[#allocation3 + $0xe0] sm:$0xf]
        %v891 = vld [vmem:[#allocation3 + $0xe4] sm:$0xff]
        %v892 = vld [vmem:[#allocation3 + $0xec] sm:$0xf]
        %v893 = vld [vmem:[#allocation3 + $0xf0] sm:$0xff]
        %v894 = vld [vmem:[#allocation3 + $0xf8] sm:$0xf]
        %v895 = vld [vmem:[#allocation3 + $0xfc] sm:$0xff]
        %v896 = vld [vmem:[#allocation3 + $0x104] sm:$0xf]
        %v897 = vld [vmem:[#allocation3 + $0x108] sm:$0xff]
        %v898 = vld [vmem:[#allocation3 + $0x110] sm:$0xf]
        %v899 = vld [vmem:[#allocation3 + $0x114] sm:$0xff]
        %v900 = vld [vmem:[#allocation3 + $0x11c] sm:$0xf]
        %v901 = vld [vmem:[#allocation3 + $0x120] sm:$0xff]
        %v902 = vld [vmem:[#allocation3 + $0x128] sm:$0xf]
        %v903 = vld [vmem:[#allocation3 + $0x12c] sm:$0xff]
        %v904 = vld [vmem:[#allocation3 + $0x134] sm:$0xf]
        %v905 = vld [vmem:[#allocation3 + $0x138] sm:$0xff]
        %v906 = vld [vmem:[#allocation3 + $0x140] sm:$0xf]
        %v907 = vld [vmem:[#allocation3 + $0x144] sm:$0xff]
        %v908 = vld [vmem:[#allocation3 + $0x14c] sm:$0xf]
        %v909 = vld [vmem:[#allocation3 + $0x150] sm:$0xff]
        %v910 = vld [vmem:[#allocation3 + $0x158] sm:$0xf]
        %v911 = vld [vmem:[#allocation3 + $0x15c] sm:$0xff]
        %v912 = vld [vmem:[#allocation3 + $0x164] sm:$0xf]
        %v913 = vld [vmem:[#allocation3 + $0x168] sm:$0xff]
        %v914 = vld [vmem:[#allocation3 + $0x170] sm:$0xf]
        %v915 = vld [vmem:[#allocation3 + $0x174] sm:$0xff]
        %v916 = vld [vmem:[#allocation3 + $0x17c] sm:$0xf]
        %v981 = vunpack.c.l.b16 %v853
        %v982 = vunpack.c.h.b16 %v853
        %v983 = vunpack.c.l.b16 %v854
        %v984 = vunpack.c.l.b16 %v855
        %v985 = vunpack.c.h.b16 %v855
        %v986 = vunpack.c.l.b16 %v856
        %v987 = vunpack.c.l.b16 %v857
        %v988 = vunpack.c.h.b16 %v857
        %v989 = vunpack.c.l.b16 %v858
        %v990 = vunpack.c.l.b16 %v859
        %v991 = vunpack.c.h.b16 %v859
        %v992 = vunpack.c.l.b16 %v860
        %v993 = vunpack.c.l.b16 %v861
        %v994 = vunpack.c.h.b16 %v861
        %v995 = vunpack.c.l.b16 %v862
        %v996 = vunpack.c.l.b16 %v863
        %v997 = vunpack.c.h.b16 %v863
        %v998 = vunpack.c.l.b16 %v864
        %v999 = vunpack.c.l.b16 %v865
        %v1000 = vunpack.c.h.b16 %v865
        %v1001 = vunpack.c.l.b16 %v866
        %v1002 = vunpack.c.l.b16 %v867
        %v1003 = vunpack.c.h.b16 %v867
        %v1004 = vunpack.c.l.b16 %v868
        %v1005 = vunpack.c.l.b16 %v869
        %v1006 = vunpack.c.h.b16 %v869
        %v1007 = vunpack.c.l.b16 %v870
        %v1008 = vunpack.c.l.b16 %v871
        %v1009 = vunpack.c.h.b16 %v871
        %v1010 = vunpack.c.l.b16 %v872
        %v1011 = vunpack.c.l.b16 %v873
        %v1012 = vunpack.c.h.b16 %v873
        %v1013 = vunpack.c.l.b16 %v874
        %v1014 = vunpack.c.l.b16 %v875
        %v1015 = vunpack.c.h.b16 %v875
        %v1016 = vunpack.c.l.b16 %v876
        %v1017 = vunpack.c.l.b16 %v877
        %v1018 = vunpack.c.h.b16 %v877
        %v1019 = vunpack.c.l.b16 %v878
        %v1020 = vunpack.c.l.b16 %v879
        %v1021 = vunpack.c.h.b16 %v879
        %v1022 = vunpack.c.l.b16 %v880
        %v1023 = vunpack.c.l.b16 %v881
        %v1024 = vunpack.c.h.b16 %v881
        %v1025 = vunpack.c.l.b16 %v882
        %v1026 = vunpack.c.l.b16 %v883
        %v1027 = vunpack.c.h.b16 %v883
        %v1028 = vunpack.c.l.b16 %v884
        %v1029 = vunpack.c.l.b16 %v885
        %v1030 = vunpack.c.h.b16 %v885
        %v1031 = vunpack.c.l.b16 %v886
        %v1032 = vunpack.c.l.b16 %v887
        %v1033 = vunpack.c.h.b16 %v887
        %v1034 = vunpack.c.l.b16 %v888
        %v1035 = vunpack.c.l.b16 %v889
        %v1036 = vunpack.c.h.b16 %v889
        %v1037 = vunpack.c.l.b16 %v890
        %v1038 = vunpack.c.l.b16 %v891
        %v1039 = vunpack.c.h.b16 %v891
        %v1040 = vunpack.c.l.b16 %v892
        %v1041 = vunpack.c.l.b16 %v893
        %v1042 = vunpack.c.h.b16 %v893
        %v1043 = vunpack.c.l.b16 %v894
        %v1044 = vunpack.c.l.b16 %v895
        %v1045 = vunpack.c.h.b16 %v895
        %v1046 = vunpack.c.l.b16 %v896
        %v1047 = vunpack.c.l.b16 %v897
        %v1048 = vunpack.c.h.b16 %v897
        %v1049 = vunpack.c.l.b16 %v898
        %v1050 = vunpack.c.l.b16 %v899
        %v1051 = vunpack.c.h.b16 %v899
        %v1052 = vunpack.c.l.b16 %v900
        %v1053 = vunpack.c.l.b16 %v901
        %v1054 = vunpack.c.h.b16 %v901
        %v1055 = vunpack.c.l.b16 %v902
        %v1056 = vunpack.c.l.b16 %v903
        %v1057 = vunpack.c.h.b16 %v903
        %v1058 = vunpack.c.l.b16 %v904
        %v1059 = vunpack.c.l.b16 %v905
        %v1060 = vunpack.c.h.b16 %v905
        %v1061 = vunpack.c.l.b16 %v906
        %v1062 = vunpack.c.l.b16 %v907
        %v1063 = vunpack.c.h.b16 %v907
        %v1064 = vunpack.c.l.b16 %v908
        %v1065 = vunpack.c.l.b16 %v909
        %v1066 = vunpack.c.h.b16 %v909
        %v1067 = vunpack.c.l.b16 %v910
        %v1068 = vunpack.c.l.b16 %v911
        %v1069 = vunpack.c.h.b16 %v911
        %v1070 = vunpack.c.l.b16 %v912
        %v1071 = vunpack.c.l.b16 %v913
        %v1072 = vunpack.c.h.b16 %v913
        %v1073 = vunpack.c.l.b16 %v914
        %v1074 = vunpack.c.l.b16 %v915
        %v1075 = vunpack.c.h.b16 %v915
        %v1076 = vunpack.c.l.b16 %v916
        %v1077 = vpack.c.b16 %v984, %v981
        %v1078 = vpack.c.b16 %v985, %v982
        %v1079 = vpack.c.b16 %v986, %v983
        %v1080 = vpack.c.b16 %v990, %v987
        %v1081 = vpack.c.b16 %v991, %v988
        %v1082 = vpack.c.b16 %v992, %v989
        %v1083 = vpack.c.b16 %v996, %v993
        %v1084 = vpack.c.b16 %v997, %v994
        %v1085 = vpack.c.b16 %v998, %v995
        %v1086 = vpack.c.b16 %v1002, %v999
        %v1087 = vpack.c.b16 %v1003, %v1000
        %v1088 = vpack.c.b16 %v1004, %v1001
        %v1089 = vpack.c.b16 %v1008, %v1005
        %v1090 = vpack.c.b16 %v1009, %v1006
        %v1091 = vpack.c.b16 %v1010, %v1007
        %v1092 = vpack.c.b16 %v1014, %v1011
        %v1093 = vpack.c.b16 %v1015, %v1012
        %v1094 = vpack.c.b16 %v1016, %v1013
        %v1095 = vpack.c.b16 %v1020, %v1017
        %v1096 = vpack.c.b16 %v1021, %v1018
        %v1097 = vpack.c.b16 %v1022, %v1019
        %v1098 = vpack.c.b16 %v1026, %v1023
        %v1099 = vpack.c.b16 %v1027, %v1024
        %v1100 = vpack.c.b16 %v1028, %v1025
        %v1101 = vpack.c.b16 %v1032, %v1029
        %v1102 = vpack.c.b16 %v1033, %v1030
        %v1103 = vpack.c.b16 %v1034, %v1031
        %v1104 = vpack.c.b16 %v1038, %v1035
        %v1105 = vpack.c.b16 %v1039, %v1036
        %v1106 = vpack.c.b16 %v1040, %v1037
        %v1107 = vpack.c.b16 %v1044, %v1041
        %v1108 = vpack.c.b16 %v1045, %v1042
        %v1109 = vpack.c.b16 %v1046, %v1043
        %v1110 = vpack.c.b16 %v1050, %v1047
        %v1111 = vpack.c.b16 %v1051, %v1048
        %v1112 = vpack.c.b16 %v1052, %v1049
        %v1113 = vpack.c.b16 %v1056, %v1053
        %v1114 = vpack.c.b16 %v1057, %v1054
        %v1115 = vpack.c.b16 %v1058, %v1055
        %v1116 = vpack.c.b16 %v1062, %v1059
        %v1117 = vpack.c.b16 %v1063, %v1060
        %v1118 = vpack.c.b16 %v1064, %v1061
        %v1119 = vpack.c.b16 %v1068, %v1065
        %v1120 = vpack.c.b16 %v1069, %v1066
        %v1121 = vpack.c.b16 %v1070, %v1067
        %v1122 = vpack.c.b16 %v1074, %v1071
        %v1123 = vpack.c.b16 %v1075, %v1072
        %v1124 = vpack.c.b16 %v1076, %v1073
        %1173 = vmatpush.bf16.msra.mxu0 %v1098
        %1174 = vmatpush.bf16.msra.mxu0 %v1095
        %1175 = vmatpush.bf16.msra.mxu0 %v1092
        %1176 = vmatpush.bf16.msra.mxu0 %v1089
        %1177 = vmatpush.bf16.msra.mxu0 %v1086
        %1178 = vmatpush.bf16.msra.mxu0 %v1083
        %1179 = vmatpush.bf16.msra.mxu0 %v1080
        %1180 = vmatpush.bf16.msra.mxu0 %v1077
        %1181 = vmatmul.bf16.gmra.mxu0 %v837
        %v1182 = vpop.f32.mrf.mxu0
        %v1183 = vadd.f32 0.0, %v1182
        %v1184 = vpop.f32.mrf.mxu0
        %v1185 = vadd.f32 0.0, %v1184
        %1186 = vmatmul.bf16.gmra.mxu0 %v839
        %v1187 = vpop.f32.mrf.mxu0
        %v1188 = vadd.f32 0.0, %v1187
        %v1189 = vpop.f32.mrf.mxu0
        %v1190 = vadd.f32 0.0, %v1189
        %1191 = vmatmul.bf16.gmra.mxu0 %v841
        %v1192 = vpop.f32.mrf.mxu0
        %v1193 = vadd.f32 0.0, %v1192
        %v1194 = vpop.f32.mrf.mxu0
        %v1195 = vadd.f32 0.0, %v1194
        %1196 = vmatmul.bf16.gmra.mxu0 %v843
        %v1197 = vpop.f32.mrf.mxu0
        %v1198 = vadd.f32 0.0, %v1197
        %v1199 = vpop.f32.mrf.mxu0
        %v1200 = vadd.f32 0.0, %v1199
        %1201 = vmatmul.bf16.gmra.mxu0 %v845
        %v1202 = vpop.f32.mrf.mxu0
        %v1203 = vadd.f32 0.0, %v1202
        %v1204 = vpop.f32.mrf.mxu0
        %v1205 = vadd.f32 0.0, %v1204
        %1206 = vmatmul.bf16.gmra.mxu0 %v847
        %v1207 = vpop.f32.mrf.mxu0
        %v1208 = vadd.f32 0.0, %v1207
        %v1209 = vpop.f32.mrf.mxu0
        %v1210 = vadd.f32 0.0, %v1209
        %1211 = vmatmul.bf16.gmra.mxu0 %v849
        %v1212 = vpop.f32.mrf.mxu0
        %v1213 = vadd.f32 0.0, %v1212
        %v1214 = vpop.f32.mrf.mxu0
        %v1215 = vadd.f32 0.0, %v1214
        %1216 = vmatmul.bf16.gmra.mxu0 %v851
        %v1217 = vpop.f32.mrf.mxu0
        %v1218 = vadd.f32 0.0, %v1217
        %v1219 = vpop.f32.mrf.mxu0
        %v1220 = vadd.f32 0.0, %v1219
        %1221 = vdwg.mxu0
        %1222 = vmatpush.bf16.msra.mxu0 %v1122
        %1223 = vmatpush.bf16.msra.mxu0 %v1119
        %1224 = vmatpush.bf16.msra.mxu0 %v1116
        %1225 = vmatpush.bf16.msra.mxu0 %v1113
        %1226 = vmatpush.bf16.msra.mxu0 %v1110
        %1227 = vmatpush.bf16.msra.mxu0 %v1107
        %1228 = vmatpush.bf16.msra.mxu0 %v1104
        %1229 = vmatpush.bf16.msra.mxu0 %v1101
        %1230 = vmatmul.bf16.gmra.mxu0 %v838
        %v1231 = vpop.f32.mrf.mxu0
        %v1232 = vadd.f32 %v1183, %v1231
        %v1233 = vpop.f32.mrf.mxu0
        %v1234 = vadd.f32 %v1185, %v1233
        %1235 = vmatmul.bf16.gmra.mxu0 %v840
        %v1236 = vpop.f32.mrf.mxu0
        %v1237 = vadd.f32 %v1188, %v1236
        %v1238 = vpop.f32.mrf.mxu0
        %v1239 = vadd.f32 %v1190, %v1238
        %1240 = vmatmul.bf16.gmra.mxu0 %v842
        %v1241 = vpop.f32.mrf.mxu0
        %v1242 = vadd.f32 %v1193, %v1241
        %v1243 = vpop.f32.mrf.mxu0
        %v1244 = vadd.f32 %v1195, %v1243
        %1245 = vmatmul.bf16.gmra.mxu0 %v844
        %v1246 = vpop.f32.mrf.mxu0
        %v1247 = vadd.f32 %v1198, %v1246
        %v1248 = vpop.f32.mrf.mxu0
        %v1249 = vadd.f32 %v1200, %v1248
        %1250 = vmatmul.bf16.gmra.mxu0 %v846
        %v1251 = vpop.f32.mrf.mxu0
        %v1252 = vadd.f32 %v1203, %v1251
        %v1253 = vpop.f32.mrf.mxu0
        %v1254 = vadd.f32 %v1205, %v1253
        %1255 = vmatmul.bf16.gmra.mxu0 %v848
        %v1256 = vpop.f32.mrf.mxu0
        %v1257 = vadd.f32 %v1208, %v1256
        %v1258 = vpop.f32.mrf.mxu0
        %v1259 = vadd.f32 %v1210, %v1258
        %1260 = vmatmul.bf16.gmra.mxu0 %v850
        %v1261 = vpop.f32.mrf.mxu0
        %v1262 = vadd.f32 %v1213, %v1261
        %v1263 = vpop.f32.mrf.mxu0
        %v1264 = vadd.f32 %v1215, %v1263
        %1265 = vmatmul.bf16.gmra.mxu0 %v852
        %v1266 = vpop.f32.mrf.mxu0
        %v1267 = vadd.f32 %v1218, %v1266
        %v1268 = vpop.f32.mrf.mxu0
        %v1269 = vadd.f32 %v1220, %v1268
        %1270 = vdwg.mxu0
        %1271 = vmatpush.bf16.msra.mxu0 %v1099
        %1272 = vmatpush.bf16.msra.mxu0 %v1096
        %1273 = vmatpush.bf16.msra.mxu0 %v1093
        %1274 = vmatpush.bf16.msra.mxu0 %v1090
        %1275 = vmatpush.bf16.msra.mxu0 %v1087
        %1276 = vmatpush.bf16.msra.mxu0 %v1084
        %1277 = vmatpush.bf16.msra.mxu0 %v1081
        %1278 = vmatpush.bf16.msra.mxu0 %v1078
        %1279 = vmatmul.bf16.gmra.mxu0 %v837
        %v1280 = vpop.f32.mrf.mxu0
        %v1281 = vadd.f32 0.0, %v1280
        %v1282 = vpop.f32.mrf.mxu0
        %v1283 = vadd.f32 0.0, %v1282
        %1284 = vmatmul.bf16.gmra.mxu0 %v839
        %v1285 = vpop.f32.mrf.mxu0
        %v1286 = vadd.f32 0.0, %v1285
        %v1287 = vpop.f32.mrf.mxu0
        %v1288 = vadd.f32 0.0, %v1287
        %1289 = vmatmul.bf16.gmra.mxu0 %v841
        %v1290 = vpop.f32.mrf.mxu0
        %v1291 = vadd.f32 0.0, %v1290
        %v1292 = vpop.f32.mrf.mxu0
        %v1293 = vadd.f32 0.0, %v1292
        %1294 = vmatmul.bf16.gmra.mxu0 %v843
        %v1295 = vpop.f32.mrf.mxu0
        %v1296 = vadd.f32 0.0, %v1295
        %v1297 = vpop.f32.mrf.mxu0
        %v1298 = vadd.f32 0.0, %v1297
        %1299 = vmatmul.bf16.gmra.mxu0 %v845
        %v1300 = vpop.f32.mrf.mxu0
        %v1301 = vadd.f32 0.0, %v1300
        %v1302 = vpop.f32.mrf.mxu0
        %v1303 = vadd.f32 0.0, %v1302
        %1304 = vmatmul.bf16.gmra.mxu0 %v847
        %v1305 = vpop.f32.mrf.mxu0
        %v1306 = vadd.f32 0.0, %v1305
        %v1307 = vpop.f32.mrf.mxu0
        %v1308 = vadd.f32 0.0, %v1307
        %1309 = vmatmul.bf16.gmra.mxu0 %v849
        %v1310 = vpop.f32.mrf.mxu0
        %v1311 = vadd.f32 0.0, %v1310
        %v1312 = vpop.f32.mrf.mxu0
        %v1313 = vadd.f32 0.0, %v1312
        %1314 = vmatmul.bf16.gmra.mxu0 %v851
        %v1315 = vpop.f32.mrf.mxu0
        %v1316 = vadd.f32 0.0, %v1315
        %v1317 = vpop.f32.mrf.mxu0
        %v1318 = vadd.f32 0.0, %v1317
        %1319 = vdwg.mxu0
        %1320 = vmatpush.bf16.msra.mxu0 %v1123
        %1321 = vmatpush.bf16.msra.mxu0 %v1120
        %1322 = vmatpush.bf16.msra.mxu0 %v1117
        %1323 = vmatpush.bf16.msra.mxu0 %v1114
        %1324 = vmatpush.bf16.msra.mxu0 %v1111
        %1325 = vmatpush.bf16.msra.mxu0 %v1108
        %1326 = vmatpush.bf16.msra.mxu0 %v1105
        %1327 = vmatpush.bf16.msra.mxu0 %v1102
        %1328 = vmatmul.bf16.gmra.mxu0 %v838
        %v1329 = vpop.f32.mrf.mxu0
        %v1330 = vadd.f32 %v1281, %v1329
        %v1331 = vpop.f32.mrf.mxu0
        %v1332 = vadd.f32 %v1283, %v1331
        %1333 = vmatmul.bf16.gmra.mxu0 %v840
        %v1334 = vpop.f32.mrf.mxu0
        %v1335 = vadd.f32 %v1286, %v1334
        %v1336 = vpop.f32.mrf.mxu0
        %v1337 = vadd.f32 %v1288, %v1336
        %1338 = vmatmul.bf16.gmra.mxu0 %v842
        %v1339 = vpop.f32.mrf.mxu0
        %v1340 = vadd.f32 %v1291, %v1339
        %v1341 = vpop.f32.mrf.mxu0
        %v1342 = vadd.f32 %v1293, %v1341
        %1343 = vmatmul.bf16.gmra.mxu0 %v844
        %v1344 = vpop.f32.mrf.mxu0
        %v1345 = vadd.f32 %v1296, %v1344
        %v1346 = vpop.f32.mrf.mxu0
        %v1347 = vadd.f32 %v1298, %v1346
        %1348 = vmatmul.bf16.gmra.mxu0 %v846
        %v1349 = vpop.f32.mrf.mxu0
        %v1350 = vadd.f32 %v1301, %v1349
        %v1351 = vpop.f32.mrf.mxu0
        %v1352 = vadd.f32 %v1303, %v1351
        %1353 = vmatmul.bf16.gmra.mxu0 %v848
        %v1354 = vpop.f32.mrf.mxu0
        %v1355 = vadd.f32 %v1306, %v1354
        %v1356 = vpop.f32.mrf.mxu0
        %v1357 = vadd.f32 %v1308, %v1356
        %1358 = vmatmul.bf16.gmra.mxu0 %v850
        %v1359 = vpop.f32.mrf.mxu0
        %v1360 = vadd.f32 %v1311, %v1359
        %v1361 = vpop.f32.mrf.mxu0
        %v1362 = vadd.f32 %v1313, %v1361
        %1363 = vmatmul.bf16.gmra.mxu0 %v852
        %v1364 = vpop.f32.mrf.mxu0
        %v1365 = vadd.f32 %v1316, %v1364
        %v1366 = vpop.f32.mrf.mxu0
        %v1367 = vadd.f32 %v1318, %v1366
        %1368 = vdwg.mxu0
        %1369 = vmatpush.bf16.msra.mxu0 %v1100
        %1370 = vmatpush.bf16.msra.mxu0 %v1097
        %1371 = vmatpush.bf16.msra.mxu0 %v1094
        %1372 = vmatpush.bf16.msra.mxu0 %v1091
        %1373 = vmatpush.bf16.msra.mxu0 %v1088
        %1374 = vmatpush.bf16.msra.mxu0 %v1085
        %1375 = vmatpush.bf16.msra.mxu0 %v1082
        %1376 = vmatpush.bf16.msra.mxu0 %v1079
        %1377 = vmatmul.bf16.gmra.mxu0 %v837
        %v1378 = vpop.f32.mrf.mxu0
        %v1379 = vadd.f32 0.0, %v1378
        %v1380 = vpop.f32.mrf.mxu0
        %v1381 = vadd.f32 0.0, %v1380
        %1382 = vmatmul.bf16.gmra.mxu0 %v839
        %v1383 = vpop.f32.mrf.mxu0
        %v1384 = vadd.f32 0.0, %v1383
        %v1385 = vpop.f32.mrf.mxu0
        %v1386 = vadd.f32 0.0, %v1385
        %1387 = vmatmul.bf16.gmra.mxu0 %v841
        %v1388 = vpop.f32.mrf.mxu0
        %v1389 = vadd.f32 0.0, %v1388
        %v1390 = vpop.f32.mrf.mxu0
        %v1391 = vadd.f32 0.0, %v1390
        %1392 = vmatmul.bf16.gmra.mxu0 %v843
        %v1393 = vpop.f32.mrf.mxu0
        %v1394 = vadd.f32 0.0, %v1393
        %v1395 = vpop.f32.mrf.mxu0
        %v1396 = vadd.f32 0.0, %v1395
        %1397 = vmatmul.bf16.gmra.mxu0 %v845
        %v1398 = vpop.f32.mrf.mxu0
        %v1399 = vadd.f32 0.0, %v1398
        %v1400 = vpop.f32.mrf.mxu0
        %v1401 = vadd.f32 0.0, %v1400
        %1402 = vmatmul.bf16.gmra.mxu0 %v847
        %v1403 = vpop.f32.mrf.mxu0
        %v1404 = vadd.f32 0.0, %v1403
        %v1405 = vpop.f32.mrf.mxu0
        %v1406 = vadd.f32 0.0, %v1405
        %1407 = vmatmul.bf16.gmra.mxu0 %v849
        %v1408 = vpop.f32.mrf.mxu0
        %v1409 = vadd.f32 0.0, %v1408
        %v1410 = vpop.f32.mrf.mxu0
        %v1411 = vadd.f32 0.0, %v1410
        %1412 = vmatmul.bf16.gmra.mxu0 %v851
        %v1413 = vpop.f32.mrf.mxu0
        %v1414 = vadd.f32 0.0, %v1413
        %v1415 = vpop.f32.mrf.mxu0
        %v1416 = vadd.f32 0.0, %v1415
        %1417 = vdwg.mxu0
        %1418 = vmatpush.bf16.msra.mxu0 %v1124
        %1419 = vmatpush.bf16.msra.mxu0 %v1121
        %1420 = vmatpush.bf16.msra.mxu0 %v1118
        %1421 = vmatpush.bf16.msra.mxu0 %v1115
        %1422 = vmatpush.bf16.msra.mxu0 %v1112
        %1423 = vmatpush.bf16.msra.mxu0 %v1109
        %1424 = vmatpush.bf16.msra.mxu0 %v1106
        %1425 = vmatpush.bf16.msra.mxu0 %v1103
        %1426 = vmatmul.bf16.gmra.mxu0 %v838
        %v1427 = vpop.f32.mrf.mxu0
        %v1428 = vadd.f32 %v1379, %v1427
        %v1429 = vpop.f32.mrf.mxu0
        %v1430 = vadd.f32 %v1381, %v1429
        %1431 = vmatmul.bf16.gmra.mxu0 %v840
        %v1432 = vpop.f32.mrf.mxu0
        %v1433 = vadd.f32 %v1384, %v1432
        %v1434 = vpop.f32.mrf.mxu0
        %v1435 = vadd.f32 %v1386, %v1434
        %1436 = vmatmul.bf16.gmra.mxu0 %v842
        %v1437 = vpop.f32.mrf.mxu0
        %v1438 = vadd.f32 %v1389, %v1437
        %v1439 = vpop.f32.mrf.mxu0
        %v1440 = vadd.f32 %v1391, %v1439
        %1441 = vmatmul.bf16.gmra.mxu0 %v844
        %v1442 = vpop.f32.mrf.mxu0
        %v1443 = vadd.f32 %v1394, %v1442
        %v1444 = vpop.f32.mrf.mxu0
        %v1445 = vadd.f32 %v1396, %v1444
        %1446 = vmatmul.bf16.gmra.mxu0 %v846
        %v1447 = vpop.f32.mrf.mxu0
        %v1448 = vadd.f32 %v1399, %v1447
        %v1449 = vpop.f32.mrf.mxu0
        %v1450 = vadd.f32 %v1401, %v1449
        %1451 = vmatmul.bf16.gmra.mxu0 %v848
        %v1452 = vpop.f32.mrf.mxu0
        %v1453 = vadd.f32 %v1404, %v1452
        %v1454 = vpop.f32.mrf.mxu0
        %v1455 = vadd.f32 %v1406, %v1454
        %1456 = vmatmul.bf16.gmra.mxu0 %v850
        %v1457 = vpop.f32.mrf.mxu0
        %v1458 = vadd.f32 %v1409, %v1457
        %v1459 = vpop.f32.mrf.mxu0
        %v1460 = vadd.f32 %v1411, %v1459
        %1461 = vmatmul.bf16.gmra.mxu0 %v852
        %v1462 = vpop.f32.mrf.mxu0
        %v1463 = vadd.f32 %v1414, %v1462
        %v1464 = vpop.f32.mrf.mxu0
        %v1465 = vadd.f32 %v1416, %v1464
        %1466 = vdwg.mxu0
        %v1531 = vunpack.c.l.b16 %v773
        %v1532 = vunpack.c.h.b16 %v773
        %v1533 = vunpack.c.l.b16 %v774
        %v1534 = vunpack.c.l.b16 %v775
        %v1535 = vunpack.c.h.b16 %v775
        %v1536 = vunpack.c.l.b16 %v776
        %v1537 = vunpack.c.l.b16 %v777
        %v1538 = vunpack.c.h.b16 %v777
        %v1539 = vunpack.c.l.b16 %v778
        %v1540 = vunpack.c.l.b16 %v779
        %v1541 = vunpack.c.h.b16 %v779
        %v1542 = vunpack.c.l.b16 %v780
        %v1543 = vunpack.c.l.b16 %v781
        %v1544 = vunpack.c.h.b16 %v781
        %v1545 = vunpack.c.l.b16 %v782
        %v1546 = vunpack.c.l.b16 %v783
        %v1547 = vunpack.c.h.b16 %v783
        %v1548 = vunpack.c.l.b16 %v784
        %v1549 = vunpack.c.l.b16 %v785
        %v1550 = vunpack.c.h.b16 %v785
        %v1551 = vunpack.c.l.b16 %v786
        %v1552 = vunpack.c.l.b16 %v787
        %v1553 = vunpack.c.h.b16 %v787
        %v1554 = vunpack.c.l.b16 %v788
        %v1555 = vunpack.c.l.b16 %v789
        %v1556 = vunpack.c.h.b16 %v789
        %v1557 = vunpack.c.l.b16 %v790
        %v1558 = vunpack.c.l.b16 %v791
        %v1559 = vunpack.c.h.b16 %v791
        %v1560 = vunpack.c.l.b16 %v792
        %v1561 = vunpack.c.l.b16 %v793
        %v1562 = vunpack.c.h.b16 %v793
        %v1563 = vunpack.c.l.b16 %v794
        %v1564 = vunpack.c.l.b16 %v795
        %v1565 = vunpack.c.h.b16 %v795
        %v1566 = vunpack.c.l.b16 %v796
        %v1567 = vunpack.c.l.b16 %v797
        %v1568 = vunpack.c.h.b16 %v797
        %v1569 = vunpack.c.l.b16 %v798
        %v1570 = vunpack.c.l.b16 %v799
        %v1571 = vunpack.c.h.b16 %v799
        %v1572 = vunpack.c.l.b16 %v800
        %v1573 = vunpack.c.l.b16 %v801
        %v1574 = vunpack.c.h.b16 %v801
        %v1575 = vunpack.c.l.b16 %v802
        %v1576 = vunpack.c.l.b16 %v803
        %v1577 = vunpack.c.h.b16 %v803
        %v1578 = vunpack.c.l.b16 %v804
        %v1579 = vunpack.c.l.b16 %v805
        %v1580 = vunpack.c.h.b16 %v805
        %v1581 = vunpack.c.l.b16 %v806
        %v1582 = vunpack.c.l.b16 %v807
        %v1583 = vunpack.c.h.b16 %v807
        %v1584 = vunpack.c.l.b16 %v808
        %v1585 = vunpack.c.l.b16 %v809
        %v1586 = vunpack.c.h.b16 %v809
        %v1587 = vunpack.c.l.b16 %v810
        %v1588 = vunpack.c.l.b16 %v811
        %v1589 = vunpack.c.h.b16 %v811
        %v1590 = vunpack.c.l.b16 %v812
        %v1591 = vunpack.c.l.b16 %v813
        %v1592 = vunpack.c.h.b16 %v813
        %v1593 = vunpack.c.l.b16 %v814
        %v1594 = vunpack.c.l.b16 %v815
        %v1595 = vunpack.c.h.b16 %v815
        %v1596 = vunpack.c.l.b16 %v816
        %v1597 = vunpack.c.l.b16 %v817
        %v1598 = vunpack.c.h.b16 %v817
        %v1599 = vunpack.c.l.b16 %v818
        %v1600 = vunpack.c.l.b16 %v819
        %v1601 = vunpack.c.h.b16 %v819
        %v1602 = vunpack.c.l.b16 %v820
        %v1603 = vunpack.c.l.b16 %v821
        %v1604 = vunpack.c.h.b16 %v821
        %v1605 = vunpack.c.l.b16 %v822
        %v1606 = vunpack.c.l.b16 %v823
        %v1607 = vunpack.c.h.b16 %v823
        %v1608 = vunpack.c.l.b16 %v824
        %v1609 = vunpack.c.l.b16 %v825
        %v1610 = vunpack.c.h.b16 %v825
        %v1611 = vunpack.c.l.b16 %v826
        %v1612 = vunpack.c.l.b16 %v827
        %v1613 = vunpack.c.h.b16 %v827
        %v1614 = vunpack.c.l.b16 %v828
        %v1615 = vunpack.c.l.b16 %v829
        %v1616 = vunpack.c.h.b16 %v829
        %v1617 = vunpack.c.l.b16 %v830
        %v1618 = vunpack.c.l.b16 %v831
        %v1619 = vunpack.c.h.b16 %v831
        %v1620 = vunpack.c.l.b16 %v832
        %v1621 = vunpack.c.l.b16 %v833
        %v1622 = vunpack.c.h.b16 %v833
        %v1623 = vunpack.c.l.b16 %v834
        %v1624 = vunpack.c.l.b16 %v835
        %v1625 = vunpack.c.h.b16 %v835
        %v1626 = vunpack.c.l.b16 %v836
        %v1627 = vpack.c.b16 %v1534, %v1531
        %v1628 = vpack.c.b16 %v1535, %v1532
        %v1629 = vpack.c.b16 %v1536, %v1533
        %v1630 = vpack.c.b16 %v1540, %v1537
        %v1631 = vpack.c.b16 %v1541, %v1538
        %v1632 = vpack.c.b16 %v1542, %v1539
        %v1633 = vpack.c.b16 %v1546, %v1543
        %v1634 = vpack.c.b16 %v1547, %v1544
        %v1635 = vpack.c.b16 %v1548, %v1545
        %v1636 = vpack.c.b16 %v1552, %v1549
        %v1637 = vpack.c.b16 %v1553, %v1550
        %v1638 = vpack.c.b16 %v1554, %v1551
        %v1639 = vpack.c.b16 %v1558, %v1555
        %v1640 = vpack.c.b16 %v1559, %v1556
        %v1641 = vpack.c.b16 %v1560, %v1557
        %v1642 = vpack.c.b16 %v1564, %v1561
        %v1643 = vpack.c.b16 %v1565, %v1562
        %v1644 = vpack.c.b16 %v1566, %v1563
        %v1645 = vpack.c.b16 %v1570, %v1567
        %v1646 = vpack.c.b16 %v1571, %v1568
        %v1647 = vpack.c.b16 %v1572, %v1569
        %v1648 = vpack.c.b16 %v1576, %v1573
        %v1649 = vpack.c.b16 %v1577, %v1574
        %v1650 = vpack.c.b16 %v1578, %v1575
        %v1651 = vpack.c.b16 %v1582, %v1579
        %v1652 = vpack.c.b16 %v1583, %v1580
        %v1653 = vpack.c.b16 %v1584, %v1581
        %v1654 = vpack.c.b16 %v1588, %v1585
        %v1655 = vpack.c.b16 %v1589, %v1586
        %v1656 = vpack.c.b16 %v1590, %v1587
        %v1657 = vpack.c.b16 %v1594, %v1591
        %v1658 = vpack.c.b16 %v1595, %v1592
        %v1659 = vpack.c.b16 %v1596, %v1593
        %v1660 = vpack.c.b16 %v1600, %v1597
        %v1661 = vpack.c.b16 %v1601, %v1598
        %v1662 = vpack.c.b16 %v1602, %v1599
        %v1663 = vpack.c.b16 %v1606, %v1603
        %v1664 = vpack.c.b16 %v1607, %v1604
        %v1665 = vpack.c.b16 %v1608, %v1605
        %v1666 = vpack.c.b16 %v1612, %v1609
        %v1667 = vpack.c.b16 %v1613, %v1610
        %v1668 = vpack.c.b16 %v1614, %v1611
        %v1669 = vpack.c.b16 %v1618, %v1615
        %v1670 = vpack.c.b16 %v1619, %v1616
        %v1671 = vpack.c.b16 %v1620, %v1617
        %v1672 = vpack.c.b16 %v1624, %v1621
        %v1673 = vpack.c.b16 %v1625, %v1622
        %v1674 = vpack.c.b16 %v1626, %v1623
        %1723 = vmatpush.bf16.msra.mxu0 %v1648
        %1724 = vmatpush.bf16.msra.mxu0 %v1645
        %1725 = vmatpush.bf16.msra.mxu0 %v1642
        %1726 = vmatpush.bf16.msra.mxu0 %v1639
        %1727 = vmatpush.bf16.msra.mxu0 %v1636
        %1728 = vmatpush.bf16.msra.mxu0 %v1633
        %1729 = vmatpush.bf16.msra.mxu0 %v1630
        %1730 = vmatpush.bf16.msra.mxu0 %v1627
        %1731 = vmatmul.bf16.gmra.mxu0 %v757
        %v1732 = vpop.f32.mrf.mxu0
        %v1733 = vadd.f32 %v1232, %v1732
        %v1734 = vpop.f32.mrf.mxu0
        %v1735 = vadd.f32 %v1234, %v1734
        %1736 = vmatmul.bf16.gmra.mxu0 %v759
        %v1737 = vpop.f32.mrf.mxu0
        %v1738 = vadd.f32 %v1237, %v1737
        %v1739 = vpop.f32.mrf.mxu0
        %v1740 = vadd.f32 %v1239, %v1739
        %1741 = vmatmul.bf16.gmra.mxu0 %v761
        %v1742 = vpop.f32.mrf.mxu0
        %v1743 = vadd.f32 %v1242, %v1742
        %v1744 = vpop.f32.mrf.mxu0
        %v1745 = vadd.f32 %v1244, %v1744
        %1746 = vmatmul.bf16.gmra.mxu0 %v763
        %v1747 = vpop.f32.mrf.mxu0
        %v1748 = vadd.f32 %v1247, %v1747
        %v1749 = vpop.f32.mrf.mxu0
        %v1750 = vadd.f32 %v1249, %v1749
        %1751 = vmatmul.bf16.gmra.mxu0 %v765
        %v1752 = vpop.f32.mrf.mxu0
        %v1753 = vadd.f32 %v1252, %v1752
        %v1754 = vpop.f32.mrf.mxu0
        %v1755 = vadd.f32 %v1254, %v1754
        %1756 = vmatmul.bf16.gmra.mxu0 %v767
        %v1757 = vpop.f32.mrf.mxu0
        %v1758 = vadd.f32 %v1257, %v1757
        %v1759 = vpop.f32.mrf.mxu0
        %v1760 = vadd.f32 %v1259, %v1759
        %1761 = vmatmul.bf16.gmra.mxu0 %v769
        %v1762 = vpop.f32.mrf.mxu0
        %v1763 = vadd.f32 %v1262, %v1762
        %v1764 = vpop.f32.mrf.mxu0
        %v1765 = vadd.f32 %v1264, %v1764
        %1766 = vmatmul.bf16.gmra.mxu0 %v771
        %v1767 = vpop.f32.mrf.mxu0
        %v1768 = vadd.f32 %v1267, %v1767
        %v1769 = vpop.f32.mrf.mxu0
        %v1770 = vadd.f32 %v1269, %v1769
        %1771 = vdwg.mxu0
        %1772 = vmatpush.bf16.msra.mxu0 %v1672
        %1773 = vmatpush.bf16.msra.mxu0 %v1669
        %1774 = vmatpush.bf16.msra.mxu0 %v1666
        %1775 = vmatpush.bf16.msra.mxu0 %v1663
        %1776 = vmatpush.bf16.msra.mxu0 %v1660
        %1777 = vmatpush.bf16.msra.mxu0 %v1657
        %1778 = vmatpush.bf16.msra.mxu0 %v1654
        %1779 = vmatpush.bf16.msra.mxu0 %v1651
        %1780 = vmatmul.bf16.gmra.mxu0 %v758
        %v1781 = vpop.f32.mrf.mxu0
        %v1782 = vadd.f32 %v1733, %v1781
        %v1783 = vpop.f32.mrf.mxu0
        %v1784 = vadd.f32 %v1735, %v1783
        %1785 = vmatmul.bf16.gmra.mxu0 %v760
        %v1786 = vpop.f32.mrf.mxu0
        %v1787 = vadd.f32 %v1738, %v1786
        %v1788 = vpop.f32.mrf.mxu0
        %v1789 = vadd.f32 %v1740, %v1788
        %1790 = vmatmul.bf16.gmra.mxu0 %v762
        %v1791 = vpop.f32.mrf.mxu0
        %v1792 = vadd.f32 %v1743, %v1791
        %v1793 = vpop.f32.mrf.mxu0
        %v1794 = vadd.f32 %v1745, %v1793
        %1795 = vmatmul.bf16.gmra.mxu0 %v764
        %v1796 = vpop.f32.mrf.mxu0
        %v1797 = vadd.f32 %v1748, %v1796
        %v1798 = vpop.f32.mrf.mxu0
        %v1799 = vadd.f32 %v1750, %v1798
        %1800 = vmatmul.bf16.gmra.mxu0 %v766
        %v1801 = vpop.f32.mrf.mxu0
        %v1802 = vadd.f32 %v1753, %v1801
        %v1803 = vpop.f32.mrf.mxu0
        %v1804 = vadd.f32 %v1755, %v1803
        %1805 = vmatmul.bf16.gmra.mxu0 %v768
        %v1806 = vpop.f32.mrf.mxu0
        %v1807 = vadd.f32 %v1758, %v1806
        %v1808 = vpop.f32.mrf.mxu0
        %v1809 = vadd.f32 %v1760, %v1808
        %1810 = vmatmul.bf16.gmra.mxu0 %v770
        %v1811 = vpop.f32.mrf.mxu0
        %v1812 = vadd.f32 %v1763, %v1811
        %v1813 = vpop.f32.mrf.mxu0
        %v1814 = vadd.f32 %v1765, %v1813
        %1815 = vmatmul.bf16.gmra.mxu0 %v772
        %v1816 = vpop.f32.mrf.mxu0
        %v1817 = vadd.f32 %v1768, %v1816
        %v1818 = vpop.f32.mrf.mxu0
        %v1819 = vadd.f32 %v1770, %v1818
        %1820 = vdwg.mxu0
        %1821 = vmatpush.bf16.msra.mxu0 %v1649
        %1822 = vmatpush.bf16.msra.mxu0 %v1646
        %1823 = vmatpush.bf16.msra.mxu0 %v1643
        %1824 = vmatpush.bf16.msra.mxu0 %v1640
        %1825 = vmatpush.bf16.msra.mxu0 %v1637
        %1826 = vmatpush.bf16.msra.mxu0 %v1634
        %1827 = vmatpush.bf16.msra.mxu0 %v1631
        %1828 = vmatpush.bf16.msra.mxu0 %v1628
        %1829 = vmatmul.bf16.gmra.mxu0 %v757
        %v1830 = vpop.f32.mrf.mxu0
        %v1831 = vadd.f32 %v1330, %v1830
        %v1832 = vpop.f32.mrf.mxu0
        %v1833 = vadd.f32 %v1332, %v1832
        %1834 = vmatmul.bf16.gmra.mxu0 %v759
        %v1835 = vpop.f32.mrf.mxu0
        %v1836 = vadd.f32 %v1335, %v1835
        %v1837 = vpop.f32.mrf.mxu0
        %v1838 = vadd.f32 %v1337, %v1837
        %1839 = vmatmul.bf16.gmra.mxu0 %v761
        %v1840 = vpop.f32.mrf.mxu0
        %v1841 = vadd.f32 %v1340, %v1840
        %v1842 = vpop.f32.mrf.mxu0
        %v1843 = vadd.f32 %v1342, %v1842
        %1844 = vmatmul.bf16.gmra.mxu0 %v763
        %v1845 = vpop.f32.mrf.mxu0
        %v1846 = vadd.f32 %v1345, %v1845
        %v1847 = vpop.f32.mrf.mxu0
        %v1848 = vadd.f32 %v1347, %v1847
        %1849 = vmatmul.bf16.gmra.mxu0 %v765
        %v1850 = vpop.f32.mrf.mxu0
        %v1851 = vadd.f32 %v1350, %v1850
        %v1852 = vpop.f32.mrf.mxu0
        %v1853 = vadd.f32 %v1352, %v1852
        %1854 = vmatmul.bf16.gmra.mxu0 %v767
        %v1855 = vpop.f32.mrf.mxu0
        %v1856 = vadd.f32 %v1355, %v1855
        %v1857 = vpop.f32.mrf.mxu0
        %v1858 = vadd.f32 %v1357, %v1857
        %1859 = vmatmul.bf16.gmra.mxu0 %v769
        %v1860 = vpop.f32.mrf.mxu0
        %v1861 = vadd.f32 %v1360, %v1860
        %v1862 = vpop.f32.mrf.mxu0
        %v1863 = vadd.f32 %v1362, %v1862
        %1864 = vmatmul.bf16.gmra.mxu0 %v771
        %v1865 = vpop.f32.mrf.mxu0
        %v1866 = vadd.f32 %v1365, %v1865
        %v1867 = vpop.f32.mrf.mxu0
        %v1868 = vadd.f32 %v1367, %v1867
        %1869 = vdwg.mxu0
        %1870 = vmatpush.bf16.msra.mxu0 %v1673
        %1871 = vmatpush.bf16.msra.mxu0 %v1670
        %1872 = vmatpush.bf16.msra.mxu0 %v1667
        %1873 = vmatpush.bf16.msra.mxu0 %v1664
        %1874 = vmatpush.bf16.msra.mxu0 %v1661
        %1875 = vmatpush.bf16.msra.mxu0 %v1658
        %1876 = vmatpush.bf16.msra.mxu0 %v1655
        %1877 = vmatpush.bf16.msra.mxu0 %v1652
        %1878 = vmatmul.bf16.gmra.mxu0 %v758
        %v1879 = vpop.f32.mrf.mxu0
        %v1880 = vadd.f32 %v1831, %v1879
        %v1881 = vpop.f32.mrf.mxu0
        %v1882 = vadd.f32 %v1833, %v1881
        %1883 = vmatmul.bf16.gmra.mxu0 %v760
        %v1884 = vpop.f32.mrf.mxu0
        %v1885 = vadd.f32 %v1836, %v1884
        %v1886 = vpop.f32.mrf.mxu0
        %v1887 = vadd.f32 %v1838, %v1886
        %1888 = vmatmul.bf16.gmra.mxu0 %v762
        %v1889 = vpop.f32.mrf.mxu0
        %v1890 = vadd.f32 %v1841, %v1889
        %v1891 = vpop.f32.mrf.mxu0
        %v1892 = vadd.f32 %v1843, %v1891
        %1893 = vmatmul.bf16.gmra.mxu0 %v764
        %v1894 = vpop.f32.mrf.mxu0
        %v1895 = vadd.f32 %v1846, %v1894
        %v1896 = vpop.f32.mrf.mxu0
        %v1897 = vadd.f32 %v1848, %v1896
        %1898 = vmatmul.bf16.gmra.mxu0 %v766
        %v1899 = vpop.f32.mrf.mxu0
        %v1900 = vadd.f32 %v1851, %v1899
        %v1901 = vpop.f32.mrf.mxu0
        %v1902 = vadd.f32 %v1853, %v1901
        %1903 = vmatmul.bf16.gmra.mxu0 %v768
        %v1904 = vpop.f32.mrf.mxu0
        %v1905 = vadd.f32 %v1856, %v1904
        %v1906 = vpop.f32.mrf.mxu0
        %v1907 = vadd.f32 %v1858, %v1906
        %1908 = vmatmul.bf16.gmra.mxu0 %v770
        %v1909 = vpop.f32.mrf.mxu0
        %v1910 = vadd.f32 %v1861, %v1909
        %v1911 = vpop.f32.mrf.mxu0
        %v1912 = vadd.f32 %v1863, %v1911
        %1913 = vmatmul.bf16.gmra.mxu0 %v772
        %v1914 = vpop.f32.mrf.mxu0
        %v1915 = vadd.f32 %v1866, %v1914
        %v1916 = vpop.f32.mrf.mxu0
        %v1917 = vadd.f32 %v1868, %v1916
        %1918 = vdwg.mxu0
        %1919 = vmatpush.bf16.msra.mxu0 %v1650
        %1920 = vmatpush.bf16.msra.mxu0 %v1647
        %1921 = vmatpush.bf16.msra.mxu0 %v1644
        %1922 = vmatpush.bf16.msra.mxu0 %v1641
        %1923 = vmatpush.bf16.msra.mxu0 %v1638
        %1924 = vmatpush.bf16.msra.mxu0 %v1635
        %1925 = vmatpush.bf16.msra.mxu0 %v1632
        %1926 = vmatpush.bf16.msra.mxu0 %v1629
        %1927 = vmatmul.bf16.gmra.mxu0 %v757
        %v1928 = vpop.f32.mrf.mxu0
        %v1929 = vadd.f32 %v1428, %v1928
        %v1930 = vpop.f32.mrf.mxu0
        %v1931 = vadd.f32 %v1430, %v1930
        %1932 = vmatmul.bf16.gmra.mxu0 %v759
        %v1933 = vpop.f32.mrf.mxu0
        %v1934 = vadd.f32 %v1433, %v1933
        %v1935 = vpop.f32.mrf.mxu0
        %v1936 = vadd.f32 %v1435, %v1935
        %1937 = vmatmul.bf16.gmra.mxu0 %v761
        %v1938 = vpop.f32.mrf.mxu0
        %v1939 = vadd.f32 %v1438, %v1938
        %v1940 = vpop.f32.mrf.mxu0
        %v1941 = vadd.f32 %v1440, %v1940
        %1942 = vmatmul.bf16.gmra.mxu0 %v763
        %v1943 = vpop.f32.mrf.mxu0
        %v1944 = vadd.f32 %v1443, %v1943
        %v1945 = vpop.f32.mrf.mxu0
        %v1946 = vadd.f32 %v1445, %v1945
        %1947 = vmatmul.bf16.gmra.mxu0 %v765
        %v1948 = vpop.f32.mrf.mxu0
        %v1949 = vadd.f32 %v1448, %v1948
        %v1950 = vpop.f32.mrf.mxu0
        %v1951 = vadd.f32 %v1450, %v1950
        %1952 = vmatmul.bf16.gmra.mxu0 %v767
        %v1953 = vpop.f32.mrf.mxu0
        %v1954 = vadd.f32 %v1453, %v1953
        %v1955 = vpop.f32.mrf.mxu0
        %v1956 = vadd.f32 %v1455, %v1955
        %1957 = vmatmul.bf16.gmra.mxu0 %v769
        %v1958 = vpop.f32.mrf.mxu0
        %v1959 = vadd.f32 %v1458, %v1958
        %v1960 = vpop.f32.mrf.mxu0
        %v1961 = vadd.f32 %v1460, %v1960
        %1962 = vmatmul.bf16.gmra.mxu0 %v771
        %v1963 = vpop.f32.mrf.mxu0
        %v1964 = vadd.f32 %v1463, %v1963
        %v1965 = vpop.f32.mrf.mxu0
        %v1966 = vadd.f32 %v1465, %v1965
        %1967 = vdwg.mxu0
        %1968 = vmatpush.bf16.msra.mxu0 %v1674
        %1969 = vmatpush.bf16.msra.mxu0 %v1671
        %1970 = vmatpush.bf16.msra.mxu0 %v1668
        %1971 = vmatpush.bf16.msra.mxu0 %v1665
        %1972 = vmatpush.bf16.msra.mxu0 %v1662
        %1973 = vmatpush.bf16.msra.mxu0 %v1659
        %1974 = vmatpush.bf16.msra.mxu0 %v1656
        %1975 = vmatpush.bf16.msra.mxu0 %v1653
        %1976 = vmatmul.bf16.gmra.mxu0 %v758
        %v1977 = vpop.f32.mrf.mxu0
        %v1978 = vadd.f32 %v1929, %v1977
        %v1979 = vpop.f32.mrf.mxu0
        %v1980 = vadd.f32 %v1931, %v1979
        %1981 = vmatmul.bf16.gmra.mxu0 %v760
        %v1982 = vpop.f32.mrf.mxu0
        %v1983 = vadd.f32 %v1934, %v1982
        %v1984 = vpop.f32.mrf.mxu0
        %v1985 = vadd.f32 %v1936, %v1984
        %1986 = vmatmul.bf16.gmra.mxu0 %v762
        %v1987 = vpop.f32.mrf.mxu0
        %v1988 = vadd.f32 %v1939, %v1987
        %v1989 = vpop.f32.mrf.mxu0
        %v1990 = vadd.f32 %v1941, %v1989
        %1991 = vmatmul.bf16.gmra.mxu0 %v764
        %v1992 = vpop.f32.mrf.mxu0
        %v1993 = vadd.f32 %v1944, %v1992
        %v1994 = vpop.f32.mrf.mxu0
        %v1995 = vadd.f32 %v1946, %v1994
        %1996 = vmatmul.bf16.gmra.mxu0 %v766
        %v1997 = vpop.f32.mrf.mxu0
        %v1998 = vadd.f32 %v1949, %v1997
        %v1999 = vpop.f32.mrf.mxu0
        %v2000 = vadd.f32 %v1951, %v1999
        %2001 = vmatmul.bf16.gmra.mxu0 %v768
        %v2002 = vpop.f32.mrf.mxu0
        %v2003 = vadd.f32 %v1954, %v2002
        %v2004 = vpop.f32.mrf.mxu0
        %v2005 = vadd.f32 %v1956, %v2004
        %2006 = vmatmul.bf16.gmra.mxu0 %v770
        %v2007 = vpop.f32.mrf.mxu0
        %v2008 = vadd.f32 %v1959, %v2007
        %v2009 = vpop.f32.mrf.mxu0
        %v2010 = vadd.f32 %v1961, %v2009
        %2011 = vmatmul.bf16.gmra.mxu0 %v772
        %v2012 = vpop.f32.mrf.mxu0
        %v2013 = vadd.f32 %v1964, %v2012
        %v2014 = vpop.f32.mrf.mxu0
        %v2015 = vadd.f32 %v1966, %v2014
        %2016 = vdwg.mxu0
        %v2018 = vperm.slane %v355, 0
        %v2019 = vperm.slane %v355, 1
        %v2020 = vperm.slane %v355, 2
        %v2024 = vadd.f32 %v1782, %v2018
        %v2025 = vadd.f32 %v1880, %v2019
        %v2026 = vadd.f32 %v1978, %v2020
        %v2027 = vadd.f32 %v1784, %v2018
        %v2028 = vadd.f32 %v1882, %v2019
        %v2029 = vadd.f32 %v1980, %v2020
        %v2030 = vadd.f32 %v1787, %v2018
        %v2031 = vadd.f32 %v1885, %v2019
        %v2032 = vadd.f32 %v1983, %v2020
        %v2033 = vadd.f32 %v1789, %v2018
        %v2034 = vadd.f32 %v1887, %v2019
        %v2035 = vadd.f32 %v1985, %v2020
        %v2036 = vadd.f32 %v1792, %v2018
        %v2037 = vadd.f32 %v1890, %v2019
        %v2038 = vadd.f32 %v1988, %v2020
        %v2039 = vadd.f32 %v1794, %v2018
        %v2040 = vadd.f32 %v1892, %v2019
        %v2041 = vadd.f32 %v1990, %v2020
        %v2042 = vadd.f32 %v1797, %v2018
        %v2043 = vadd.f32 %v1895, %v2019
        %v2044 = vadd.f32 %v1993, %v2020
        %v2045 = vadd.f32 %v1799, %v2018
        %v2046 = vadd.f32 %v1897, %v2019
        %v2047 = vadd.f32 %v1995, %v2020
        %v2048 = vadd.f32 %v1802, %v2018
        %v2049 = vadd.f32 %v1900, %v2019
        %v2050 = vadd.f32 %v1998, %v2020
        %v2051 = vadd.f32 %v1804, %v2018
        %v2052 = vadd.f32 %v1902, %v2019
        %v2053 = vadd.f32 %v2000, %v2020
        %v2054 = vadd.f32 %v1807, %v2018
        %v2055 = vadd.f32 %v1905, %v2019
        %v2056 = vadd.f32 %v2003, %v2020
        %v2057 = vadd.f32 %v1809, %v2018
        %v2058 = vadd.f32 %v1907, %v2019
        %v2059 = vadd.f32 %v2005, %v2020
        %v2060 = vadd.f32 %v1812, %v2018
        %v2061 = vadd.f32 %v1910, %v2019
        %v2062 = vadd.f32 %v2008, %v2020
        %v2063 = vadd.f32 %v1814, %v2018
        %v2064 = vadd.f32 %v1912, %v2019
        %v2065 = vadd.f32 %v2010, %v2020
        %v2066 = vadd.f32 %v1817, %v2018
        %v2067 = vadd.f32 %v1915, %v2019
        %v2068 = vadd.f32 %v2013, %v2020
        %v2069 = vadd.f32 %v1819, %v2018
        %v2070 = vadd.f32 %v1917, %v2019
        %v2071 = vadd.f32 %v2015, %v2020
        %v2072 = vmax.f32 %v2024, 0.0
        %v2073 = vmax.f32 %v2025, 0.0
        %v2074 = vmax.f32 %v2026, 0.0
        %v2075 = vmax.f32 %v2027, 0.0
        %v2076 = vmax.f32 %v2028, 0.0
        %v2077 = vmax.f32 %v2029, 0.0
        %v2078 = vmax.f32 %v2030, 0.0
        %v2079 = vmax.f32 %v2031, 0.0
        %v2080 = vmax.f32 %v2032, 0.0
        %v2081 = vmax.f32 %v2033, 0.0
        %v2082 = vmax.f32 %v2034, 0.0
        %v2083 = vmax.f32 %v2035, 0.0
        %v2084 = vmax.f32 %v2036, 0.0
        %v2085 = vmax.f32 %v2037, 0.0
        %v2086 = vmax.f32 %v2038, 0.0
        %v2087 = vmax.f32 %v2039, 0.0
        %v2088 = vmax.f32 %v2040, 0.0
        %v2089 = vmax.f32 %v2041, 0.0
        %v2090 = vmax.f32 %v2042, 0.0
        %v2091 = vmax.f32 %v2043, 0.0
        %v2092 = vmax.f32 %v2044, 0.0
        %v2093 = vmax.f32 %v2045, 0.0
        %v2094 = vmax.f32 %v2046, 0.0
        %v2095 = vmax.f32 %v2047, 0.0
        %v2096 = vmax.f32 %v2048, 0.0
        %v2097 = vmax.f32 %v2049, 0.0
        %v2098 = vmax.f32 %v2050, 0.0
        %v2099 = vmax.f32 %v2051, 0.0
        %v2100 = vmax.f32 %v2052, 0.0
        %v2101 = vmax.f32 %v2053, 0.0
        %v2102 = vmax.f32 %v2054, 0.0
        %v2103 = vmax.f32 %v2055, 0.0
        %v2104 = vmax.f32 %v2056, 0.0
        %v2105 = vmax.f32 %v2057, 0.0
        %v2106 = vmax.f32 %v2058, 0.0
        %v2107 = vmax.f32 %v2059, 0.0
        %v2108 = vmax.f32 %v2060, 0.0
        %v2109 = vmax.f32 %v2061, 0.0
        %v2110 = vmax.f32 %v2062, 0.0
        %v2111 = vmax.f32 %v2063, 0.0
        %v2112 = vmax.f32 %v2064, 0.0
        %v2113 = vmax.f32 %v2065, 0.0
        %v2114 = vmax.f32 %v2066, 0.0
        %v2115 = vmax.f32 %v2067, 0.0
        %v2116 = vmax.f32 %v2068, 0.0
        %v2117 = vmax.f32 %v2069, 0.0
        %v2118 = vmax.f32 %v2070, 0.0
        %v2119 = vmax.f32 %v2071, 0.0
        %v2121 = vperm.slane %v357, 0
        %v2122 = vperm.slane %v357, 1
        %v2123 = vperm.slane %v357, 2
        %v2127 = vmul.f32 %v2072, %v2121
        %v2128 = vmul.f32 %v2073, %v2122
        %v2129 = vmul.f32 %v2074, %v2123
        %v2130 = vmul.f32 %v2075, %v2121
        %v2131 = vmul.f32 %v2076, %v2122
        %v2132 = vmul.f32 %v2077, %v2123
        %v2133 = vmul.f32 %v2078, %v2121
        %v2134 = vmul.f32 %v2079, %v2122
        %v2135 = vmul.f32 %v2080, %v2123
        %v2136 = vmul.f32 %v2081, %v2121
        %v2137 = vmul.f32 %v2082, %v2122
        %v2138 = vmul.f32 %v2083, %v2123
        %v2139 = vmul.f32 %v2084, %v2121
        %v2140 = vmul.f32 %v2085, %v2122
        %v2141 = vmul.f32 %v2086, %v2123
        %v2142 = vmul.f32 %v2087, %v2121
        %v2143 = vmul.f32 %v2088, %v2122
        %v2144 = vmul.f32 %v2089, %v2123
        %v2145 = vmul.f32 %v2090, %v2121
        %v2146 = vmul.f32 %v2091, %v2122
        %v2147 = vmul.f32 %v2092, %v2123
        %v2148 = vmul.f32 %v2093, %v2121
        %v2149 = vmul.f32 %v2094, %v2122
        %v2150 = vmul.f32 %v2095, %v2123
        %v2151 = vmul.f32 %v2096, %v2121
        %v2152 = vmul.f32 %v2097, %v2122
        %v2153 = vmul.f32 %v2098, %v2123
        %v2154 = vmul.f32 %v2099, %v2121
        %v2155 = vmul.f32 %v2100, %v2122
        %v2156 = vmul.f32 %v2101, %v2123
        %v2157 = vmul.f32 %v2102, %v2121
        %v2158 = vmul.f32 %v2103, %v2122
        %v2159 = vmul.f32 %v2104, %v2123
        %v2160 = vmul.f32 %v2105, %v2121
        %v2161 = vmul.f32 %v2106, %v2122
        %v2162 = vmul.f32 %v2107, %v2123
        %v2163 = vmul.f32 %v2108, %v2121
        %v2164 = vmul.f32 %v2109, %v2122
        %v2165 = vmul.f32 %v2110, %v2123
        %v2166 = vmul.f32 %v2111, %v2121
        %v2167 = vmul.f32 %v2112, %v2122
        %v2168 = vmul.f32 %v2113, %v2123
        %v2169 = vmul.f32 %v2114, %v2121
        %v2170 = vmul.f32 %v2115, %v2122
        %v2171 = vmul.f32 %v2116, %v2123
        %v2172 = vmul.f32 %v2117, %v2121
        %v2173 = vmul.f32 %v2118, %v2122
        %v2174 = vmul.f32 %v2119, %v2123
        %v2175 = vadd.f32 %v2127, %v2128
        %v2176 = vadd.f32 %v2175, %v2129
        %2177 = vadd.xlane.f32.xlu0 %v2176
        %v2178 = vpop.xlane.xlu0 %2177
        %v2179 = vadd.f32 %v2130, %v2131
        %v2180 = vadd.f32 %v2179, %v2132
        %2181 = vadd.xlane.f32.xlu0 %v2180
        %v2182 = vpop.xlane.xlu0 %2181
        %v2183 = vadd.f32 %v2133, %v2134
        %v2184 = vadd.f32 %v2183, %v2135
        %2185 = vadd.xlane.f32.xlu0 %v2184
        %v2186 = vpop.xlane.xlu0 %2185
        %v2187 = vadd.f32 %v2136, %v2137
        %v2188 = vadd.f32 %v2187, %v2138
        %2189 = vadd.xlane.f32.xlu0 %v2188
        %v2190 = vpop.xlane.xlu0 %2189
        %v2191 = vadd.f32 %v2139, %v2140
        %v2192 = vadd.f32 %v2191, %v2141
        %2193 = vadd.xlane.f32.xlu0 %v2192
        %v2194 = vpop.xlane.xlu0 %2193
        %v2195 = vadd.f32 %v2142, %v2143
        %v2196 = vadd.f32 %v2195, %v2144
        %2197 = vadd.xlane.f32.xlu0 %v2196
        %v2198 = vpop.xlane.xlu0 %2197
        %v2199 = vadd.f32 %v2145, %v2146
        %v2200 = vadd.f32 %v2199, %v2147
        %2201 = vadd.xlane.f32.xlu0 %v2200
        %v2202 = vpop.xlane.xlu0 %2201
        %v2203 = vadd.f32 %v2148, %v2149
        %v2204 = vadd.f32 %v2203, %v2150
        %2205 = vadd.xlane.f32.xlu0 %v2204
        %v2206 = vpop.xlane.xlu0 %2205
        %v2207 = vadd.f32 %v2151, %v2152
        %v2208 = vadd.f32 %v2207, %v2153
        %2209 = vadd.xlane.f32.xlu0 %v2208
        %v2210 = vpop.xlane.xlu0 %2209
        %v2211 = vadd.f32 %v2154, %v2155
        %v2212 = vadd.f32 %v2211, %v2156
        %2213 = vadd.xlane.f32.xlu0 %v2212
        %v2214 = vpop.xlane.xlu0 %2213
        %v2215 = vadd.f32 %v2157, %v2158
        %v2216 = vadd.f32 %v2215, %v2159
        %2217 = vadd.xlane.f32.xlu0 %v2216
        %v2218 = vpop.xlane.xlu0 %2217
        %v2219 = vadd.f32 %v2160, %v2161
        %v2220 = vadd.f32 %v2219, %v2162
        %2221 = vadd.xlane.f32.xlu0 %v2220
        %v2222 = vpop.xlane.xlu0 %2221
        %v2223 = vadd.f32 %v2163, %v2164
        %v2224 = vadd.f32 %v2223, %v2165
        %2225 = vadd.xlane.f32.xlu0 %v2224
        %v2226 = vpop.xlane.xlu0 %2225
        %v2227 = vadd.f32 %v2166, %v2167
        %v2228 = vadd.f32 %v2227, %v2168
        %2229 = vadd.xlane.f32.xlu0 %v2228
        %v2230 = vpop.xlane.xlu0 %2229
        %v2231 = vadd.f32 %v2169, %v2170
        %v2232 = vadd.f32 %v2231, %v2171
        %2233 = vadd.xlane.f32.xlu0 %v2232
        %v2234 = vpop.xlane.xlu0 %2233
        %v2235 = vadd.f32 %v2172, %v2173
        %v2236 = vadd.f32 %v2235, %v2174
        %2237 = vadd.xlane.f32.xlu0 %v2236
        %v2238 = vpop.xlane.xlu0 %2237
        %s2239 = sld [smem:[#allocation2]]
        %v2240 = vstv %s2239
        %v2241 = vadd.f32 %v2178, %v2240
        %v2242 = vadd.f32 %v2182, %v2240
        %v2243 = vadd.f32 %v2186, %v2240
        %v2244 = vadd.f32 %v2190, %v2240
        %v2245 = vadd.f32 %v2194, %v2240
        %v2246 = vadd.f32 %v2198, %v2240
        %v2247 = vadd.f32 %v2202, %v2240
        %v2248 = vadd.f32 %v2206, %v2240
        %v2249 = vadd.f32 %v2210, %v2240
        %v2250 = vadd.f32 %v2214, %v2240
        %v2251 = vadd.f32 %v2218, %v2240
        %v2252 = vadd.f32 %v2222, %v2240
        %v2253 = vadd.f32 %v2226, %v2240
        %v2254 = vadd.f32 %v2230, %v2240
        %v2255 = vadd.f32 %v2234, %v2240
        %v2256 = vadd.f32 %v2238, %v2240
        %vm2257 = vcmask 7168
        %2258 = vst.msk [vmem:[%s347] sm:$0xff] %vm2257, %v2241
        %2259 = vst.msk [vmem:[%s347 + $0x8] sm:$0xff] %vm2257, %v2242
        %2260 = vst.msk [vmem:[%s347 + $0x10] sm:$0xff] %vm2257, %v2243
        %2261 = vst.msk [vmem:[%s347 + $0x18] sm:$0xff] %vm2257, %v2244
        %2262 = vst.msk [vmem:[%s347 + $0x20] sm:$0xff] %vm2257, %v2245
        %2263 = vst.msk [vmem:[%s347 + $0x28] sm:$0xff] %vm2257, %v2246
        %2264 = vst.msk [vmem:[%s347 + $0x30] sm:$0xff] %vm2257, %v2247
        %2265 = vst.msk [vmem:[%s347 + $0x38] sm:$0xff] %vm2257, %v2248
        %2266 = vst.msk [vmem:[%s347 + $0x40] sm:$0xff] %vm2257, %v2249
        %2267 = vst.msk [vmem:[%s347 + $0x48] sm:$0xff] %vm2257, %v2250
        %2268 = vst.msk [vmem:[%s347 + $0x50] sm:$0xff] %vm2257, %v2251
        %2269 = vst.msk [vmem:[%s347 + $0x58] sm:$0xff] %vm2257, %v2252
        %2270 = vst.msk [vmem:[%s347 + $0x60] sm:$0xff] %vm2257, %v2253
        %2271 = vst.msk [vmem:[%s347 + $0x68] sm:$0xff] %vm2257, %v2254
        %2272 = vst.msk [vmem:[%s347 + $0x70] sm:$0xff] %vm2257, %v2255
        %2273 = vst.msk [vmem:[%s347 + $0x78] sm:$0xff] %vm2257, %v2256
        %s2274 = smul.u32 16, %s21
        %p2275 = scmp.lt.s32.totalorder %s2274, 31
        %s2276 = scalar_select %p2275, %s2274, 31
        %s2277 = smul.addr %s2276, 8
        %s2278 = scalar_lea.vmem %s8, %s2277
        // Predicated region
        $region57: #{tpu_custom_call.1} parent=51 // pred_check
          %p2279 = pneg %p217
        $region58: #{tpu_custom_call.1} parent=51 // pred_check_branch
          %2281 = sbr.rel (%p2279) target = $region60
        $region59: #{tpu_custom_call.1} parent=51 // pred_region
          %s2282 = smul.u32 16, %s21
        $region60: #{tpu_custom_call.1} parent=51 // pred_fallthru
          _
      $region52: #{tpu_custom_call.1} parent=5 // pred_fallthru
        _
      %p2283 = scmp.le.s32.totalorder 2, %s16
      // Predicated region
      $region61: #{tpu_custom_call.1} parent=5 // pred_check
        %p2284 = pneg %p2283
      $region62: #{tpu_custom_call.1} parent=5 // pred_check_branch
        %2286 = sbr.rel (%p2284) target = $region64
      $region63: #{tpu_custom_call.1} parent=5 // pred_region
        %s2287 = ssub.s32 %s16, 2
        // Predicated region
        $region65: #{tpu_custom_call.1} parent=63 // pred_check
          %p2288 = pneg %p223
        $region66: #{tpu_custom_call.1} parent=63 // pred_check_branch
          %2290 = sbr.rel (%p2288) target = $region68
        $region67: #{tpu_custom_call.1} parent=63 // pred_region
          %s2291 = smul.u32 16, %s22
          %p2292 = scmp.lt.s32.totalorder %s2291, 31
          %s2293 = scalar_select %p2292, %s2291, 31
          %s2294 = smul.addr %s2293, 8
          %s2295 = scalar_lea.vmem %s8, %s2294
        $region68: #{tpu_custom_call.1} parent=63 // pred_fallthru
          _
      $region64: #{tpu_custom_call.1} parent=5 // pred_fallthru
        _
    $region6: #{tpu_custom_call.1} parent=1 // loop_footer
      %s20 = sadd.s32 1, %s16
    $region7: #{tpu_custom_call.1} parent=1 // loop_footer_branch
      %15 = sbr.rel target = $region3
    $region8: #{tpu_custom_call.1} parent=1 // loop_exit
      _
    %2296 = vsyncpa [#allocation4], 1
    %s2297 = scalar_lea.sflag [#allocation4], 1
    %2298 = vsyncpa %s2297, 1

</llo_original>
